<compile_context>
chip_gen: v7x
topology: tpu7x:2x2x1
jax: 0.10.0
libtpu: 0.0.40
codegen_flags: <defaults>
</compile_context>

<pallas_src>
import functools

import jax
import jax.numpy as jnp
from jax import lax
from jax.experimental import pallas as pl
from jax.experimental.pallas import tpu as pltpu


def _mc_head_kernel(conf_index,
                    pooled_ref, wp_ref, bp_ref, mask_ref, wl_ref, bl_ref,
                    out_ref):
    # ---- feature "extractor" stem: (Bp, C) pooled -> projection -> ReLU.
    # K = C is tiny (4): C static broadcast-FMAs on the VPU, not an MXU K=4 dot.
    pooled = pooled_ref[...]                                     # (Bp, C)
    wp = wp_ref[...]                                             # (C, F)
    acc = pooled[:, 0:1] * wp[0:1, :]                            # (Bp, F)
    for c in range(1, wp.shape[0]):                              # static unroll, C small
        acc = acc + pooled[:, c:c + 1] * wp[c:c + 1, :]

    # ---- fused bias + ReLU + averaged-MC-dropout mask (single VPU epilogue),
    #      then one dense (Bp,F)x(F,NCP) MXU matmul (MC passes collapsed exactly).
    dropped = jnp.maximum(acc + bp_ref[...], 0.0) * mask_ref[...]        # (Bp, F)
    logits = jnp.dot(dropped, wl_ref[...],
                     preferred_element_type=jnp.float32) + bl_ref[...]   # (Bp, NCP)

    # ---- argmax (first occurrence) + softmax confidence column.
    # Padded columns carry bias -1e30, so they never win the max and their
    # exp() underflows to exactly 0 in the denominator.
    mx = jnp.max(logits, axis=1, keepdims=True)                  # (Bp, 1)
    ncp = logits.shape[1]
    col = lax.broadcasted_iota(jnp.int32, logits.shape, 1)       # (Bp, NCP)
    amax = jnp.min(jnp.where(logits == mx, col, ncp),
                   axis=1, keepdims=True)                        # (Bp, 1) int32
    e = jnp.exp(logits - mx)
    denom = jnp.sum(e, axis=1, keepdims=True)
    conf = e[:, conf_index:conf_index + 1] / denom               # exact softmax column

    # ---- lane-dense (Bp, NCP) output slab: col 0 = index, col 1 = confidence.
    idx_f = amax.astype(jnp.float32)
    out_ref[...] = jnp.where(col == 0, idx_f,
                             jnp.where(col == 1, conf, 0.0))


def mc_model_forward(image_nchw, params, *, conf_index, num_mc=50, key=None):
    """image_nchw: (B, C, H, W) float32.

    Returns (out_idx (B,1) int32, conf (B,1) float32) — the MC-dropout-averaged
    argmax class and the softmax confidence at `conf_index`.
    """
    wp, bp, wl, bl = params
    B, C, H, W = image_nchw.shape
    F = wp.shape[1]
    NC = wl.shape[1]
    NCP = 128                      # lane-dense padded head width
    assert NC <= NCP and 0 <= conf_index < NC
    assert num_mc <= 64

    # Pad batch to a sublane-friendly size; padded rows are sliced off at the end.
    Bp = max(8, ((B + 7) // 8) * 8)

    # Global average pool in XLA (free), then pad batch -> tiny (Bp, C) kernel input.
    pooled = jnp.mean(image_nchw.astype(jnp.float32), axis=(2, 3))       # (B, C)
    pooled = jnp.zeros((Bp, C), jnp.float32).at[:B].set(pooled)

    # Averaged inverted-dropout mask: per element, sum of num_mc iid Bernoulli(0.5)
    # == popcount of num_mc random bits (exact Binomial(num_mc, 0.5)), scaled by
    # keep-scale (1/p = 2) / num_mc.  One or two u32 draws instead of 50 masks.
    if key is None:
        key = jax.random.PRNGKey(0)
    k_lo, k_hi = jax.random.split(key)

    def _popcount_draw(k, nbits):
        bits = jax.random.bits(k, (Bp, F), dtype=jnp.uint32)
        if nbits < 32:
            bits = bits & jnp.uint32((1 << nbits) - 1)
        return lax.population_count(bits)

    cnt = _popcount_draw(k_lo, min(num_mc, 32))
    if num_mc > 32:
        cnt = cnt + _popcount_draw(k_hi, num_mc - 32)
    mask_mean = cnt.astype(jnp.float32) * (2.0 / num_mc)                 # (Bp, F)

    # Zero-pad the linear head to NCP lanes; padded bias slots get -1e30 so the
    # padded logits can never win the argmax nor contribute to the softmax.
    wl_p = jnp.zeros((F, NCP), jnp.float32).at[:, :NC].set(wl.astype(jnp.float32))
    bl_p = jnp.full((1, NCP), -1e30, jnp.float32).at[:, :NC].set(bl.astype(jnp.float32))

    out = pl.pallas_call(
        functools.partial(_mc_head_kernel, conf_index),
        out_shape=jax.ShapeDtypeStruct((Bp, NCP), jnp.float32),
        grid=(1,),
        in_specs=[
            pl.BlockSpec((Bp, C), lambda i: (0, 0)),     # pooled features
            pl.BlockSpec((C, F), lambda i: (0, 0)),      # stem weight
            pl.BlockSpec((1, F), lambda i: (0, 0)),      # stem bias
            pl.BlockSpec((Bp, F), lambda i: (0, 0)),     # averaged MC-dropout mask
            pl.BlockSpec((F, NCP), lambda i: (0, 0)),    # head weight (lane-padded)
            pl.BlockSpec((1, NCP), lambda i: (0, 0)),    # head bias  (lane-padded)
        ],
        out_specs=pl.BlockSpec((Bp, NCP), lambda i: (0, 0)),
        compiler_params=pltpu.CompilerParams(
            dimension_semantics=("arbitrary",)),
    )(pooled, wp, bp, mask_mean, wl_p, bl_p)

    out_idx = out[:B, 0:1].astype(jnp.int32)
    conf = out[:B, 1:2]
    return out_idx, conf


def init_params(key, c_in, feat_dim, num_classes):
    k1, k2 = jax.random.split(key)
    wp = jax.random.normal(k1, (c_in, feat_dim), jnp.float32) * 0.05
    bp = jnp.zeros((1, feat_dim), jnp.float32)
    wl = jax.random.normal(k2, (feat_dim, num_classes), jnp.float32) * 0.02
    bl = jnp.zeros((1, num_classes), jnp.float32)
    return wp, bp, wl, bl


if __name__ == "__main__":
    B, C, H, W = 2, 4, 16, 16
    FEAT_DIM = 2048          # matches nn.Linear(2048, num_classes)
    NUM_CLASSES = 10
    CONF_INDEX = 1
    NUM_MC = 50

    key = jax.random.PRNGKey(0)
    k_img, k_par, k_mc = jax.random.split(key, 3)
    image = jax.random.normal(k_img, (B, C, H, W), jnp.float32)   # NCHW, like PyTorch
    params = init_params(k_par, C, FEAT_DIM, NUM_CLASSES)

    out_idx, conf = mc_model_forward(
        image, params, conf_index=CONF_INDEX, num_mc=NUM_MC, key=k_mc)
    jax.block_until_ready((out_idx, conf))

    assert out_idx.shape == (B, 1) and out_idx.dtype == jnp.int32
    assert conf.shape == (B, 1) and conf.dtype == jnp.float32
    assert bool(jnp.all((out_idx >= 0) & (out_idx < NUM_CLASSES)))
    assert bool(jnp.all((conf >= 0.0) & (conf <= 1.0)))

    print("KERNEL_OK")
</pallas_src>

<mosaic_0001>
module attributes {stable_mosaic.version = 11 : i64} {
  func.func @_mc_head_kernel(%arg0: i32, %arg1: memref<8x4xf32, #tpu.memory_space<vmem>>, %arg2: memref<4x2048xf32, #tpu.memory_space<vmem>>, %arg3: memref<1x2048xf32, #tpu.memory_space<vmem>>, %arg4: memref<8x2048xf32, #tpu.memory_space<vmem>>, %arg5: memref<2048x128xf32, #tpu.memory_space<vmem>>, %arg6: memref<1x128xf32, #tpu.memory_space<vmem>>, %arg7: memref<8x128xf32, #tpu.memory_space<vmem>>) attributes {dimension_semantics = [#tpu.dimension_semantics<arbitrary>], iteration_bounds = array<i64: 1>, scalar_prefetch = 0 : i64, scratch_operands = 0 : i64, tpu.core_type = #tpu.core_type<tc>, window_params = [{pipeline_mode = #tpu.pipeline_mode<synchronous>, transform_indices = @transform_0, window_bounds = array<i64: 8, 4>}, {pipeline_mode = #tpu.pipeline_mode<synchronous>, transform_indices = @transform_1, window_bounds = array<i64: 4, 2048>}, {pipeline_mode = #tpu.pipeline_mode<synchronous>, transform_indices = @transform_2, window_bounds = array<i64: 1, 2048>}, {pipeline_mode = #tpu.pipeline_mode<synchronous>, transform_indices = @transform_3, window_bounds = array<i64: 8, 2048>}, {pipeline_mode = #tpu.pipeline_mode<synchronous>, transform_indices = @transform_4, window_bounds = array<i64: 2048, 128>}, {pipeline_mode = #tpu.pipeline_mode<synchronous>, transform_indices = @transform_5, window_bounds = array<i64: 1, 128>}, {pipeline_mode = #tpu.pipeline_mode<synchronous>, transform_indices = @transform_6, window_bounds = array<i64: 8, 128>}]} {
    %c0 = arith.constant 0 : index
    %c0_0 = arith.constant 0 : index
    %0 = vector.load %arg1[%c0, %c0_0] : memref<8x4xf32, #tpu.memory_space<vmem>>, vector<8x4xf32>
    %c0_1 = arith.constant 0 : index
    %c0_2 = arith.constant 0 : index
    %1 = vector.load %arg2[%c0_1, %c0_2] : memref<4x2048xf32, #tpu.memory_space<vmem>>, vector<4x2048xf32>
    %2 = vector.extract_strided_slice %0 {offsets = [0, 0], sizes = [8, 1], strides = [1, 1]} : vector<8x4xf32> to vector<8x1xf32>
    %3 = vector.extract_strided_slice %1 {offsets = [0, 0], sizes = [1, 2048], strides = [1, 1]} : vector<4x2048xf32> to vector<1x2048xf32>
    %4 = vector.broadcast %2 : vector<8x1xf32> to vector<8x2048xf32>
    %5 = vector.broadcast %3 : vector<1x2048xf32> to vector<8x2048xf32>
    %6 = arith.mulf %4, %5 : vector<8x2048xf32>
    %7 = vector.extract_strided_slice %0 {offsets = [0, 1], sizes = [8, 1], strides = [1, 1]} : vector<8x4xf32> to vector<8x1xf32>
    %8 = vector.extract_strided_slice %1 {offsets = [1, 0], sizes = [1, 2048], strides = [1, 1]} : vector<4x2048xf32> to vector<1x2048xf32>
    %9 = vector.broadcast %7 : vector<8x1xf32> to vector<8x2048xf32>
    %10 = vector.broadcast %8 : vector<1x2048xf32> to vector<8x2048xf32>
    %11 = arith.mulf %9, %10 : vector<8x2048xf32>
    %12 = arith.addf %6, %11 : vector<8x2048xf32>
    %13 = vector.extract_strided_slice %0 {offsets = [0, 2], sizes = [8, 1], strides = [1, 1]} : vector<8x4xf32> to vector<8x1xf32>
    %14 = vector.extract_strided_slice %1 {offsets = [2, 0], sizes = [1, 2048], strides = [1, 1]} : vector<4x2048xf32> to vector<1x2048xf32>
    %15 = vector.broadcast %13 : vector<8x1xf32> to vector<8x2048xf32>
    %16 = vector.broadcast %14 : vector<1x2048xf32> to vector<8x2048xf32>
    %17 = arith.mulf %15, %16 : vector<8x2048xf32>
    %18 = arith.addf %12, %17 : vector<8x2048xf32>
    %19 = vector.extract_strided_slice %0 {offsets = [0, 3], sizes = [8, 1], strides = [1, 1]} : vector<8x4xf32> to vector<8x1xf32>
    %20 = vector.extract_strided_slice %1 {offsets = [3, 0], sizes = [1, 2048], strides = [1, 1]} : vector<4x2048xf32> to vector<1x2048xf32>
    %21 = vector.broadcast %19 : vector<8x1xf32> to vector<8x2048xf32>
    %22 = vector.broadcast %20 : vector<1x2048xf32> to vector<8x2048xf32>
    %23 = arith.mulf %21, %22 : vector<8x2048xf32>
    %24 = arith.addf %18, %23 : vector<8x2048xf32>
    %c0_3 = arith.constant 0 : index
    %c0_4 = arith.constant 0 : index
    %25 = vector.load %arg3[%c0_3, %c0_4] : memref<1x2048xf32, #tpu.memory_space<vmem>>, vector<1x2048xf32>
    %26 = vector.broadcast %25 : vector<1x2048xf32> to vector<8x2048xf32>
    %27 = arith.addf %24, %26 : vector<8x2048xf32>
    %cst = arith.constant 0.000000e+00 : f32
    %28 = vector.broadcast %cst : f32 to vector<8x2048xf32>
    %29 = arith.maximumf %27, %28 : vector<8x2048xf32>
    %c0_5 = arith.constant 0 : index
    %c0_6 = arith.constant 0 : index
    %30 = vector.load %arg4[%c0_5, %c0_6] : memref<8x2048xf32, #tpu.memory_space<vmem>>, vector<8x2048xf32>
    %31 = arith.mulf %29, %30 : vector<8x2048xf32>
    %c0_7 = arith.constant 0 : index
    %c0_8 = arith.constant 0 : index
    %32 = vector.load %arg5[%c0_7, %c0_8] : memref<2048x128xf32, #tpu.memory_space<vmem>>, vector<2048x128xf32>
    %cst_9 = arith.constant dense<0.000000e+00> : vector<8x128xf32>
    %33 = tpu.matmul %31, %32, %cst_9 {dimension_numbers = #tpu.dot_dimension_numbers<[1], [0], [0], [1], [0, 0, 1, 1], [], []>} : vector<8x2048xf32>, vector<2048x128xf32>, vector<8x128xf32> -> vector<8x128xf32>
    %c0_10 = arith.constant 0 : index
    %c0_11 = arith.constant 0 : index
    %34 = vector.load %arg6[%c0_10, %c0_11] : memref<1x128xf32, #tpu.memory_space<vmem>>, vector<1x128xf32>
    %35 = vector.broadcast %34 : vector<1x128xf32> to vector<8x128xf32>
    %36 = arith.addf %33, %35 : vector<8x128xf32>
    %cst_12 = arith.constant dense<0xFF800000> : vector<8xf32>
    %37 = vector.multi_reduction <maximumf>, %36, %cst_12 [1] : vector<8x128xf32> to vector<8xf32>
    %38 = vector.shape_cast %37 : vector<8xf32> to vector<8x1xf32>
    %39 = tpu.iota {dimensions = array<i32: 1>} : vector<8x128xi32>
    %40 = vector.broadcast %38 : vector<8x1xf32> to vector<8x128xf32>
    %41 = arith.cmpf oeq, %36, %40 : vector<8x128xf32>
    %c128_i32 = arith.constant 128 : i32
    %42 = vector.broadcast %c128_i32 : i32 to vector<8x128xi32>
    %43 = arith.select %41, %39, %42 : vector<8x128xi1>, vector<8x128xi32>
    %cst_13 = arith.constant dense<2147483647> : vector<8xi32>
    %44 = vector.multi_reduction <minsi>, %43, %cst_13 [1] : vector<8x128xi32> to vector<8xi32>
    %45 = vector.shape_cast %44 : vector<8xi32> to vector<8x1xi32>
    %46 = vector.broadcast %38 : vector<8x1xf32> to vector<8x128xf32>
    %47 = arith.subf %36, %46 : vector<8x128xf32>
    %48 = math.exp %47 : vector<8x128xf32>
    %cst_14 = arith.constant dense<0.000000e+00> : vector<8xf32>
    %49 = vector.multi_reduction <add>, %48, %cst_14 [1] : vector<8x128xf32> to vector<8xf32>
    %50 = vector.shape_cast %49 : vector<8xf32> to vector<8x1xf32>
    %51 = vector.extract_strided_slice %48 {offsets = [0, 1], sizes = [8, 1], strides = [1, 1]} : vector<8x128xf32> to vector<8x1xf32>
    %52 = arith.divf %51, %50 : vector<8x1xf32>
    %53 = arith.sitofp %45 : vector<8x1xi32> to vector<8x1xf32>
    %c0_i32 = arith.constant 0 : i32
    %54 = vector.broadcast %c0_i32 : i32 to vector<8x128xi32>
    %55 = arith.cmpi eq, %39, %54 : vector<8x128xi32>
    %c1_i32 = arith.constant 1 : i32
    %56 = vector.broadcast %c1_i32 : i32 to vector<8x128xi32>
    %57 = arith.cmpi eq, %39, %56 : vector<8x128xi32>
    %cst_15 = arith.constant 0.000000e+00 : f32
    %58 = vector.shape_cast %52 : vector<8x1xf32> to vector<8x1xf32>
    %59 = vector.broadcast %58 : vector<8x1xf32> to vector<8x128xf32>
    %60 = vector.broadcast %cst_15 : f32 to vector<8x128xf32>
    %61 = arith.select %57, %59, %60 : vector<8x128xi1>, vector<8x128xf32>
    %62 = vector.shape_cast %53 : vector<8x1xf32> to vector<8x1xf32>
    %63 = vector.broadcast %62 : vector<8x1xf32> to vector<8x128xf32>
    %64 = arith.select %55, %63, %61 : vector<8x128xi1>, vector<8x128xf32>
    %c0_16 = arith.constant 0 : index
    %c0_17 = arith.constant 0 : index
    %65 = vector.load %arg7[%c0_16, %c0_17] : memref<8x128xf32, #tpu.memory_space<vmem>>, vector<8x128xf32>
    tpu.vector_store %arg7[%c0_16, %c0_17], %64 {strides = array<i32>} : memref<8x128xf32, #tpu.memory_space<vmem>>, vector<8x128xf32>,
    return
  }
  func.func @transform_0(%arg0: i32) -> (i32, i32) {
    %c0_i32 = arith.constant 0 : i32
    %c0_i32_0 = arith.constant 0 : i32
    %c0_i32_1 = arith.constant 0 : i32
    return %c0_i32, %c0_i32_0 : i32, i32
  }
  func.func @transform_1(%arg0: i32) -> (i32, i32) {
    %c0_i32 = arith.constant 0 : i32
    %c0_i32_0 = arith.constant 0 : i32
    %c0_i32_1 = arith.constant 0 : i32
    return %c0_i32, %c0_i32_0 : i32, i32
  }
  func.func @transform_2(%arg0: i32) -> (i32, i32) {
    %c0_i32 = arith.constant 0 : i32
    %c0_i32_0 = arith.constant 0 : i32
    %c0_i32_1 = arith.constant 0 : i32
    return %c0_i32, %c0_i32_0 : i32, i32
  }
  func.func @transform_3(%arg0: i32) -> (i32, i32) {
    %c0_i32 = arith.constant 0 : i32
    %c0_i32_0 = arith.constant 0 : i32
    %c0_i32_1 = arith.constant 0 : i32
    return %c0_i32, %c0_i32_0 : i32, i32
  }
  func.func @transform_4(%arg0: i32) -> (i32, i32) {
    %c0_i32 = arith.constant 0 : i32
    %c0_i32_0 = arith.constant 0 : i32
    %c0_i32_1 = arith.constant 0 : i32
    return %c0_i32, %c0_i32_0 : i32, i32
  }
  func.func @transform_5(%arg0: i32) -> (i32, i32) {
    %c0_i32 = arith.constant 0 : i32
    %c0_i32_0 = arith.constant 0 : i32
    %c0_i32_1 = arith.constant 0 : i32
    return %c0_i32, %c0_i32_0 : i32, i32
  }
  func.func @transform_6(%arg0: i32) -> (i32, i32) {
    %c0_i32 = arith.constant 0 : i32
    %c0_i32_0 = arith.constant 0 : i32
    %c0_i32_1 = arith.constant 0 : i32
    return %c0_i32, %c0_i32_0 : i32, i32
  }
}

</mosaic_0001>

<llo_original>
// kernel: tpu_custom_call.1
$region0: #{tpu_custom_call.1}
  #allocation0 [shape = 'u32[]', space=smem, size = 0x4, offset = 0x4, fixed_abs, tag = 'smem constant byte address 0x4 - core index']
  #allocation1 [shape = 'u32[144,128]{1,0:T(1,128)}', space=vmem, size = 0x12000, scoped, tag = 'internal scratch']
  %s0 = inlined_call_operand.vmem [shape: f32[8,4], index: 0, kind: input, shape index: {}]
  %s1 = inlined_call_operand.hbm [shape: f32[4,2048], index: 1, kind: input, shape index: {}]
  %s2 = inlined_call_operand.vmem [shape: f32[1,2048], index: 2, kind: input, shape index: {}]
  %s3 = inlined_call_operand.hbm [shape: f32[8,2048], index: 3, kind: input, shape index: {}]
  %s4 = inlined_call_operand.hbm [shape: f32[2048,128], index: 4, kind: input, shape index: {}]
  %s5 = inlined_call_operand.vmem [shape: f32[1,128], index: 5, kind: input, shape index: {}]
  %s6 = inlined_call_operand.hbm [shape: f32[8,128], index: 6, kind: output, shape index: {}]
  %s7 = sld [smem:[#allocation0]]
  $region46: #{tpu_custom_call.1} parent=0
    _
  %s9 = ssub.s32 1, %s7
  %s10 = scalar_select 0, %s9, %s7
  $region1: #{tpu_custom_call.1} parent=0
    #allocation2 [shape = 'u8[32768]{0}', space=vmem, size = 0x8000, scoped, tag = 'input window, operand 1, single buffered']
    #allocation3 [shape = 's32[1]{0}', space=sflag, size = 0x4, scoped, tag = 'scoped memory for tpu_custom_call.1']
    #allocation4 [shape = 's32[1]{0}', space=sflag, size = 0x4, scoped, tag = 'scoped memory for tpu_custom_call.1']
    #allocation5 [shape = 'u8[65536]{0}', space=vmem, size = 0x10000, scoped, tag = 'input window, operand 3, single buffered']
    #allocation6 [shape = 's32[1]{0}', space=sflag, size = 0x4, scoped, tag = 'scoped memory for tpu_custom_call.1']
    #allocation7 [shape = 'u8[1048576]{0}', space=vmem, size = 0x100000, scoped, tag = 'input window, operand 4, single buffered']
    #allocation8 [shape = 'u8[4096]{0}', space=vmem, size = 0x1000, scoped, tag = 'output window, operand 0, single buffered']
    %11 = vsyncpa [#allocation3], 0
    %12 = vsyncpa [#allocation6], 0
    %13 = vsyncpa [#allocation4], 0
    // Predicated region
    $region2: #{tpu_custom_call.1} parent=1 // pred_check
      _
    $region3: #{tpu_custom_call.1} parent=1 // pred_check_branch
      %15 = sbr.rel (0) target = $region5
    $region4: #{tpu_custom_call.1} parent=1 // pred_region
      _
    $region5: #{tpu_custom_call.1} parent=1 // pred_fallthru
      _
    // Predicated region
    $region6: #{tpu_custom_call.1} parent=1 // pred_check
      _
    $region7: #{tpu_custom_call.1} parent=1 // pred_check_branch
      %17 = sbr.rel (0) target = $region9
    $region8: #{tpu_custom_call.1} parent=1 // pred_region
      %s19 = ssub.s32 1024, 1024
      %20 = vsyncadd [#allocation3], %s19
      %s22 = sshll.u32 [#allocation2], 4
      %s23 = int_to_ptr.vmem [resolvable:$true] %s22
      %25 = dma.hbm_to_vmem [thread:$0]  %s1, 1024, %s23, [#allocation3]
    $region9: #{tpu_custom_call.1} parent=1 // pred_fallthru
      _
    // Predicated region
    $region10: #{tpu_custom_call.1} parent=1 // pred_check
      _
    $region11: #{tpu_custom_call.1} parent=1 // pred_check_branch
      %27 = sbr.rel (0) target = $region13
    $region12: #{tpu_custom_call.1} parent=1 // pred_region
      _
    $region13: #{tpu_custom_call.1} parent=1 // pred_fallthru
      _
    // Predicated region
    $region14: #{tpu_custom_call.1} parent=1 // pred_check
      _
    $region15: #{tpu_custom_call.1} parent=1 // pred_check_branch
      %29 = sbr.rel (0) target = $region17
    $region16: #{tpu_custom_call.1} parent=1 // pred_region
      %s31 = ssub.s32 2048, 2048
      %32 = vsyncadd [#allocation6], %s31
      %s34 = sshll.u32 [#allocation5], 4
      %s35 = int_to_ptr.vmem [resolvable:$true] %s34
      %37 = dma.hbm_to_vmem [thread:$0]  %s3, 2048, %s35, [#allocation6]
    $region17: #{tpu_custom_call.1} parent=1 // pred_fallthru
      _
    // Predicated region
    $region18: #{tpu_custom_call.1} parent=1 // pred_check
      _
    $region19: #{tpu_custom_call.1} parent=1 // pred_check_branch
      %39 = sbr.rel (0) target = $region21
    $region20: #{tpu_custom_call.1} parent=1 // pred_region
      %s41 = ssub.s32 32768, 32768
      %42 = vsyncadd [#allocation6], %s41
      %s43 = sshll.u32 [#allocation7], 4
      %s44 = int_to_ptr.vmem [resolvable:$true] %s43
      %49 = dma.hbm_to_vmem [thread:$0]  %s4, 32768, %s44, [#allocation6], 128, 128, 8
    $region21: #{tpu_custom_call.1} parent=1 // pred_fallthru
      _
    // Predicated region
    $region22: #{tpu_custom_call.1} parent=1 // pred_check
      _
    $region23: #{tpu_custom_call.1} parent=1 // pred_check_branch
      %51 = sbr.rel (0) target = $region25
    $region24: #{tpu_custom_call.1} parent=1 // pred_region
      _
    $region25: #{tpu_custom_call.1} parent=1 // pred_fallthru
      _
    // Predicated region
    $region26: #{tpu_custom_call.1} parent=1 // pred_check
      _
    $region27: #{tpu_custom_call.1} parent=1 // pred_check_branch
      %53 = sbr.rel (0) target = $region29
    $region28: #{tpu_custom_call.1} parent=1 // pred_region
      %54 = dma.done [#allocation3], 1024
    $region29: #{tpu_custom_call.1} parent=1 // pred_fallthru
      _
    // Predicated region
    $region30: #{tpu_custom_call.1} parent=1 // pred_check
      _
    $region31: #{tpu_custom_call.1} parent=1 // pred_check_branch
      %56 = sbr.rel (0) target = $region33
    $region32: #{tpu_custom_call.1} parent=1 // pred_region
      %57 = dma.done [#allocation6], 2048
    $region33: #{tpu_custom_call.1} parent=1 // pred_fallthru
      _
    // Predicated region
    $region34: #{tpu_custom_call.1} parent=1 // pred_check
      _
    $region35: #{tpu_custom_call.1} parent=1 // pred_check_branch
      %59 = sbr.rel (0) target = $region37
    $region36: #{tpu_custom_call.1} parent=1 // pred_region
      %60 = dma.done [#allocation6], 32768
    $region37: #{tpu_custom_call.1} parent=1 // pred_fallthru
      _
    %v61 = vld [vmem:[%s0] sm:$0xff]
    %v62 = vld [vmem:[#allocation2] sm:$0xff]
    %v63 = vld [vmem:[#allocation2 + $0x8] sm:$0xff]
    %v64 = vld [vmem:[#allocation2 + $0x10] sm:$0xff]
    %v65 = vld [vmem:[#allocation2 + $0x18] sm:$0xff]
    %v66 = vld [vmem:[#allocation2 + $0x20] sm:$0xff]
    %v67 = vld [vmem:[#allocation2 + $0x28] sm:$0xff]
    %v68 = vld [vmem:[#allocation2 + $0x30] sm:$0xff]
    %v69 = vld [vmem:[#allocation2 + $0x38] sm:$0xff]
    %71 = vset.pattern.permute.xlu0 0
    %72 = vperm.xlu0 %71, %v61
    %v73 = vpop.permute.xlu0 %72
    %v83 = vlaneseq
    %v84 = vshrl.u32 %v83, 7
    %v85 = vsub.s32 0, %v84
    %v86 = vrot.slane %v62, %v85
    %v87 = vlaneseq
    %v88 = vshrl.u32 %v87, 7
    %v89 = vsub.s32 4, %v88
    %v90 = vrot.slane %v62, %v89
    %v91 = vlaneseq
    %v92 = vshrl.u32 %v91, 7
    %v93 = vsub.s32 0, %v92
    %v94 = vrot.slane %v63, %v93
    %v95 = vlaneseq
    %v96 = vshrl.u32 %v95, 7
    %v97 = vsub.s32 4, %v96
    %v98 = vrot.slane %v63, %v97
    %v99 = vlaneseq
    %v100 = vshrl.u32 %v99, 7
    %v101 = vsub.s32 0, %v100
    %v102 = vrot.slane %v64, %v101
    %v103 = vlaneseq
    %v104 = vshrl.u32 %v103, 7
    %v105 = vsub.s32 4, %v104
    %v106 = vrot.slane %v64, %v105
    %v107 = vlaneseq
    %v108 = vshrl.u32 %v107, 7
    %v109 = vsub.s32 0, %v108
    %v110 = vrot.slane %v65, %v109
    %v111 = vlaneseq
    %v112 = vshrl.u32 %v111, 7
    %v113 = vsub.s32 4, %v112
    %v114 = vrot.slane %v65, %v113
    %v115 = vlaneseq
    %v116 = vshrl.u32 %v115, 7
    %v117 = vsub.s32 0, %v116
    %v118 = vrot.slane %v66, %v117
    %v119 = vlaneseq
    %v120 = vshrl.u32 %v119, 7
    %v121 = vsub.s32 4, %v120
    %v122 = vrot.slane %v66, %v121
    %v123 = vlaneseq
    %v124 = vshrl.u32 %v123, 7
    %v125 = vsub.s32 0, %v124
    %v126 = vrot.slane %v67, %v125
    %v127 = vlaneseq
    %v128 = vshrl.u32 %v127, 7
    %v129 = vsub.s32 4, %v128
    %v130 = vrot.slane %v67, %v129
    %v131 = vlaneseq
    %v132 = vshrl.u32 %v131, 7
    %v133 = vsub.s32 0, %v132
    %v134 = vrot.slane %v68, %v133
    %v135 = vlaneseq
    %v136 = vshrl.u32 %v135, 7
    %v137 = vsub.s32 4, %v136
    %v138 = vrot.slane %v68, %v137
    %v139 = vlaneseq
    %v140 = vshrl.u32 %v139, 7
    %v141 = vsub.s32 0, %v140
    %v142 = vrot.slane %v69, %v141
    %v143 = vlaneseq
    %v144 = vshrl.u32 %v143, 7
    %v145 = vsub.s32 4, %v144
    %v146 = vrot.slane %v69, %v145
    %v163 = vlaneseq
    %v164 = vshrl.u32 %v163, 7
    %v165 = vsub.s32 0, %v164
    %v166 = vrot.slane %v86, %v165
    %v167 = vlaneseq
    %v168 = vshrl.u32 %v167, 7
    %v169 = vsub.s32 0, %v168
    %v170 = vrot.slane %v90, %v169
    %v171 = vlaneseq
    %v172 = vshrl.u32 %v171, 7
    %v173 = vsub.s32 0, %v172
    %v174 = vrot.slane %v94, %v173
    %v175 = vlaneseq
    %v176 = vshrl.u32 %v175, 7
    %v177 = vsub.s32 0, %v176
    %v178 = vrot.slane %v98, %v177
    %v179 = vlaneseq
    %v180 = vshrl.u32 %v179, 7
    %v181 = vsub.s32 0, %v180
    %v182 = vrot.slane %v102, %v181
    %v183 = vlaneseq
    %v184 = vshrl.u32 %v183, 7
    %v185 = vsub.s32 0, %v184
    %v186 = vrot.slane %v106, %v185
    %v187 = vlaneseq
    %v188 = vshrl.u32 %v187, 7
    %v189 = vsub.s32 0, %v188
    %v190 = vrot.slane %v110, %v189
    %v191 = vlaneseq
    %v192 = vshrl.u32 %v191, 7
    %v193 = vsub.s32 0, %v192
    %v194 = vrot.slane %v114, %v193
    %v195 = vlaneseq
    %v196 = vshrl.u32 %v195, 7
    %v197 = vsub.s32 0, %v196
    %v198 = vrot.slane %v118, %v197
    %v199 = vlaneseq
    %v200 = vshrl.u32 %v199, 7
    %v201 = vsub.s32 0, %v200
    %v202 = vrot.slane %v122, %v201
    %v203 = vlaneseq
    %v204 = vshrl.u32 %v203, 7
    %v205 = vsub.s32 0, %v204
    %v206 = vrot.slane %v126, %v205
    %v207 = vlaneseq
    %v208 = vshrl.u32 %v207, 7
    %v209 = vsub.s32 0, %v208
    %v210 = vrot.slane %v130, %v209
    %v211 = vlaneseq
    %v212 = vshrl.u32 %v211, 7
    %v213 = vsub.s32 0, %v212
    %v214 = vrot.slane %v134, %v213
    %v215 = vlaneseq
    %v216 = vshrl.u32 %v215, 7
    %v217 = vsub.s32 0, %v216
    %v218 = vrot.slane %v138, %v217
    %v219 = vlaneseq
    %v220 = vshrl.u32 %v219, 7
    %v221 = vsub.s32 0, %v220
    %v222 = vrot.slane %v142, %v221
    %v223 = vlaneseq
    %v224 = vshrl.u32 %v223, 7
    %v225 = vsub.s32 0, %v224
    %v226 = vrot.slane %v146, %v225
    %v227 = vmul.f32 %v73, %v166
    %v228 = vmul.f32 %v73, %v170
    %v229 = vmul.f32 %v73, %v174
    %v230 = vmul.f32 %v73, %v178
    %v231 = vmul.f32 %v73, %v182
    %v232 = vmul.f32 %v73, %v186
    %v233 = vmul.f32 %v73, %v190
    %v234 = vmul.f32 %v73, %v194
    %v235 = vmul.f32 %v73, %v198
    %v236 = vmul.f32 %v73, %v202
    %v237 = vmul.f32 %v73, %v206
    %v238 = vmul.f32 %v73, %v210
    %v239 = vmul.f32 %v73, %v214
    %v240 = vmul.f32 %v73, %v218
    %v241 = vmul.f32 %v73, %v222
    %v242 = vmul.f32 %v73, %v226
    %243 = vset.pattern.permute.xlu0 1
    %244 = vperm.xlu0 %243, %v61
    %v245 = vpop.permute.xlu0 %244
    %v247 = vlaneseq
    %v248 = vshrl.u32 %v247, 7
    %v249 = vsub.s32 1, %v248
    %v250 = vrot.slane %v62, %v249
    %v251 = vlaneseq
    %v252 = vshrl.u32 %v251, 7
    %v253 = vsub.s32 5, %v252
    %v254 = vrot.slane %v62, %v253
    %v255 = vlaneseq
    %v256 = vshrl.u32 %v255, 7
    %v257 = vsub.s32 1, %v256
    %v258 = vrot.slane %v63, %v257
    %v259 = vlaneseq
    %v260 = vshrl.u32 %v259, 7
    %v261 = vsub.s32 5, %v260
    %v262 = vrot.slane %v63, %v261
    %v263 = vlaneseq
    %v264 = vshrl.u32 %v263, 7
    %v265 = vsub.s32 1, %v264
    %v266 = vrot.slane %v64, %v265
    %v267 = vlaneseq
    %v268 = vshrl.u32 %v267, 7
    %v269 = vsub.s32 5, %v268
    %v270 = vrot.slane %v64, %v269
    %v271 = vlaneseq
    %v272 = vshrl.u32 %v271, 7
    %v273 = vsub.s32 1, %v272
    %v274 = vrot.slane %v65, %v273
    %v275 = vlaneseq
    %v276 = vshrl.u32 %v275, 7
    %v277 = vsub.s32 5, %v276
    %v278 = vrot.slane %v65, %v277
    %v279 = vlaneseq
    %v280 = vshrl.u32 %v279, 7
    %v281 = vsub.s32 1, %v280
    %v282 = vrot.slane %v66, %v281
    %v283 = vlaneseq
    %v284 = vshrl.u32 %v283, 7
    %v285 = vsub.s32 5, %v284
    %v286 = vrot.slane %v66, %v285
    %v287 = vlaneseq
    %v288 = vshrl.u32 %v287, 7
    %v289 = vsub.s32 1, %v288
    %v290 = vrot.slane %v67, %v289
    %v291 = vlaneseq
    %v292 = vshrl.u32 %v291, 7
    %v293 = vsub.s32 5, %v292
    %v294 = vrot.slane %v67, %v293
    %v295 = vlaneseq
    %v296 = vshrl.u32 %v295, 7
    %v297 = vsub.s32 1, %v296
    %v298 = vrot.slane %v68, %v297
    %v299 = vlaneseq
    %v300 = vshrl.u32 %v299, 7
    %v301 = vsub.s32 5, %v300
    %v302 = vrot.slane %v68, %v301
    %v303 = vlaneseq
    %v304 = vshrl.u32 %v303, 7
    %v305 = vsub.s32 1, %v304
    %v306 = vrot.slane %v69, %v305
    %v307 = vlaneseq
    %v308 = vshrl.u32 %v307, 7
    %v309 = vsub.s32 5, %v308
    %v310 = vrot.slane %v69, %v309
    %v327 = vlaneseq
    %v328 = vshrl.u32 %v327, 7
    %v329 = vsub.s32 1, %v328
    %v330 = vrot.slane %v250, %v329
    %v331 = vlaneseq
    %v332 = vshrl.u32 %v331, 7
    %v333 = vsub.s32 1, %v332
    %v334 = vrot.slane %v254, %v333
    %v335 = vlaneseq
    %v336 = vshrl.u32 %v335, 7
    %v337 = vsub.s32 1, %v336
    %v338 = vrot.slane %v258, %v337
    %v339 = vlaneseq
    %v340 = vshrl.u32 %v339, 7
    %v341 = vsub.s32 1, %v340
    %v342 = vrot.slane %v262, %v341
    %v343 = vlaneseq
    %v344 = vshrl.u32 %v343, 7
    %v345 = vsub.s32 1, %v344
    %v346 = vrot.slane %v266, %v345
    %v347 = vlaneseq
    %v348 = vshrl.u32 %v347, 7
    %v349 = vsub.s32 1, %v348
    %v350 = vrot.slane %v270, %v349
    %v351 = vlaneseq
    %v352 = vshrl.u32 %v351, 7
    %v353 = vsub.s32 1, %v352
    %v354 = vrot.slane %v274, %v353
    %v355 = vlaneseq
    %v356 = vshrl.u32 %v355, 7
    %v357 = vsub.s32 1, %v356
    %v358 = vrot.slane %v278, %v357
    %v359 = vlaneseq
    %v360 = vshrl.u32 %v359, 7
    %v361 = vsub.s32 1, %v360
    %v362 = vrot.slane %v282, %v361
    %v363 = vlaneseq
    %v364 = vshrl.u32 %v363, 7
    %v365 = vsub.s32 1, %v364
    %v366 = vrot.slane %v286, %v365
    %v367 = vlaneseq
    %v368 = vshrl.u32 %v367, 7
    %v369 = vsub.s32 1, %v368
    %v370 = vrot.slane %v290, %v369
    %v371 = vlaneseq
    %v372 = vshrl.u32 %v371, 7
    %v373 = vsub.s32 1, %v372
    %v374 = vrot.slane %v294, %v373
    %v375 = vlaneseq
    %v376 = vshrl.u32 %v375, 7
    %v377 = vsub.s32 1, %v376
    %v378 = vrot.slane %v298, %v377
    %v379 = vlaneseq
    %v380 = vshrl.u32 %v379, 7
    %v381 = vsub.s32 1, %v380
    %v382 = vrot.slane %v302, %v381
    %v383 = vlaneseq
    %v384 = vshrl.u32 %v383, 7
    %v385 = vsub.s32 1, %v384
    %v386 = vrot.slane %v306, %v385
    %v387 = vlaneseq
    %v388 = vshrl.u32 %v387, 7
    %v389 = vsub.s32 1, %v388
    %v390 = vrot.slane %v310, %v389
    %v391 = vmul.f32 %v245, %v330
    %v392 = vmul.f32 %v245, %v334
    %v393 = vmul.f32 %v245, %v338
    %v394 = vmul.f32 %v245, %v342
    %v395 = vmul.f32 %v245, %v346
    %v396 = vmul.f32 %v245, %v350
    %v397 = vmul.f32 %v245, %v354
    %v398 = vmul.f32 %v245, %v358
    %v399 = vmul.f32 %v245, %v362
    %v400 = vmul.f32 %v245, %v366
    %v401 = vmul.f32 %v245, %v370
    %v402 = vmul.f32 %v245, %v374
    %v403 = vmul.f32 %v245, %v378
    %v404 = vmul.f32 %v245, %v382
    %v405 = vmul.f32 %v245, %v386
    %v406 = vmul.f32 %v245, %v390
    %v407 = vadd.f32 %v227, %v391
    %v408 = vadd.f32 %v228, %v392
    %v409 = vadd.f32 %v229, %v393
    %v410 = vadd.f32 %v230, %v394
    %v411 = vadd.f32 %v231, %v395
    %v412 = vadd.f32 %v232, %v396
    %v413 = vadd.f32 %v233, %v397
    %v414 = vadd.f32 %v234, %v398
    %v415 = vadd.f32 %v235, %v399
    %v416 = vadd.f32 %v236, %v400
    %v417 = vadd.f32 %v237, %v401
    %v418 = vadd.f32 %v238, %v402
    %v419 = vadd.f32 %v239, %v403
    %v420 = vadd.f32 %v240, %v404
    %v421 = vadd.f32 %v241, %v405
    %v422 = vadd.f32 %v242, %v406
    %423 = vset.pattern.permute.xlu0 2
    %424 = vperm.xlu0 %423, %v61
    %v425 = vpop.permute.xlu0 %424
    %v427 = vlaneseq
    %v428 = vshrl.u32 %v427, 7
    %v429 = vsub.s32 2, %v428
    %v430 = vrot.slane %v62, %v429
    %v431 = vlaneseq
    %v432 = vshrl.u32 %v431, 7
    %v433 = vsub.s32 6, %v432
    %v434 = vrot.slane %v62, %v433
    %v435 = vlaneseq
    %v436 = vshrl.u32 %v435, 7
    %v437 = vsub.s32 2, %v436
    %v438 = vrot.slane %v63, %v437
    %v439 = vlaneseq
    %v440 = vshrl.u32 %v439, 7
    %v441 = vsub.s32 6, %v440
    %v442 = vrot.slane %v63, %v441
    %v443 = vlaneseq
    %v444 = vshrl.u32 %v443, 7
    %v445 = vsub.s32 2, %v444
    %v446 = vrot.slane %v64, %v445
    %v447 = vlaneseq
    %v448 = vshrl.u32 %v447, 7
    %v449 = vsub.s32 6, %v448
    %v450 = vrot.slane %v64, %v449
    %v451 = vlaneseq
    %v452 = vshrl.u32 %v451, 7
    %v453 = vsub.s32 2, %v452
    %v454 = vrot.slane %v65, %v453
    %v455 = vlaneseq
    %v456 = vshrl.u32 %v455, 7
    %v457 = vsub.s32 6, %v456
    %v458 = vrot.slane %v65, %v457
    %v459 = vlaneseq
    %v460 = vshrl.u32 %v459, 7
    %v461 = vsub.s32 2, %v460
    %v462 = vrot.slane %v66, %v461
    %v463 = vlaneseq
    %v464 = vshrl.u32 %v463, 7
    %v465 = vsub.s32 6, %v464
    %v466 = vrot.slane %v66, %v465
    %v467 = vlaneseq
    %v468 = vshrl.u32 %v467, 7
    %v469 = vsub.s32 2, %v468
    %v470 = vrot.slane %v67, %v469
    %v471 = vlaneseq
    %v472 = vshrl.u32 %v471, 7
    %v473 = vsub.s32 6, %v472
    %v474 = vrot.slane %v67, %v473
    %v475 = vlaneseq
    %v476 = vshrl.u32 %v475, 7
    %v477 = vsub.s32 2, %v476
    %v478 = vrot.slane %v68, %v477
    %v479 = vlaneseq
    %v480 = vshrl.u32 %v479, 7
    %v481 = vsub.s32 6, %v480
    %v482 = vrot.slane %v68, %v481
    %v483 = vlaneseq
    %v484 = vshrl.u32 %v483, 7
    %v485 = vsub.s32 2, %v484
    %v486 = vrot.slane %v69, %v485
    %v487 = vlaneseq
    %v488 = vshrl.u32 %v487, 7
    %v489 = vsub.s32 6, %v488
    %v490 = vrot.slane %v69, %v489
    %v507 = vlaneseq
    %v508 = vshrl.u32 %v507, 7
    %v509 = vsub.s32 2, %v508
    %v510 = vrot.slane %v430, %v509
    %v511 = vlaneseq
    %v512 = vshrl.u32 %v511, 7
    %v513 = vsub.s32 2, %v512
    %v514 = vrot.slane %v434, %v513
    %v515 = vlaneseq
    %v516 = vshrl.u32 %v515, 7
    %v517 = vsub.s32 2, %v516
    %v518 = vrot.slane %v438, %v517
    %v519 = vlaneseq
    %v520 = vshrl.u32 %v519, 7
    %v521 = vsub.s32 2, %v520
    %v522 = vrot.slane %v442, %v521
    %v523 = vlaneseq
    %v524 = vshrl.u32 %v523, 7
    %v525 = vsub.s32 2, %v524
    %v526 = vrot.slane %v446, %v525
    %v527 = vlaneseq
    %v528 = vshrl.u32 %v527, 7
    %v529 = vsub.s32 2, %v528
    %v530 = vrot.slane %v450, %v529
    %v531 = vlaneseq
    %v532 = vshrl.u32 %v531, 7
    %v533 = vsub.s32 2, %v532
    %v534 = vrot.slane %v454, %v533
    %v535 = vlaneseq
    %v536 = vshrl.u32 %v535, 7
    %v537 = vsub.s32 2, %v536
    %v538 = vrot.slane %v458, %v537
    %v539 = vlaneseq
    %v540 = vshrl.u32 %v539, 7
    %v541 = vsub.s32 2, %v540
    %v542 = vrot.slane %v462, %v541
    %v543 = vlaneseq
    %v544 = vshrl.u32 %v543, 7
    %v545 = vsub.s32 2, %v544
    %v546 = vrot.slane %v466, %v545
    %v547 = vlaneseq
    %v548 = vshrl.u32 %v547, 7
    %v549 = vsub.s32 2, %v548
    %v550 = vrot.slane %v470, %v549
    %v551 = vlaneseq
    %v552 = vshrl.u32 %v551, 7
    %v553 = vsub.s32 2, %v552
    %v554 = vrot.slane %v474, %v553
    %v555 = vlaneseq
    %v556 = vshrl.u32 %v555, 7
    %v557 = vsub.s32 2, %v556
    %v558 = vrot.slane %v478, %v557
    %v559 = vlaneseq
    %v560 = vshrl.u32 %v559, 7
    %v561 = vsub.s32 2, %v560
    %v562 = vrot.slane %v482, %v561
    %v563 = vlaneseq
    %v564 = vshrl.u32 %v563, 7
    %v565 = vsub.s32 2, %v564
    %v566 = vrot.slane %v486, %v565
    %v567 = vlaneseq
    %v568 = vshrl.u32 %v567, 7
    %v569 = vsub.s32 2, %v568
    %v570 = vrot.slane %v490, %v569
    %v571 = vmul.f32 %v425, %v510
    %v572 = vmul.f32 %v425, %v514
    %v573 = vmul.f32 %v425, %v518
    %v574 = vmul.f32 %v425, %v522
    %v575 = vmul.f32 %v425, %v526
    %v576 = vmul.f32 %v425, %v530
    %v577 = vmul.f32 %v425, %v534
    %v578 = vmul.f32 %v425, %v538
    %v579 = vmul.f32 %v425, %v542
    %v580 = vmul.f32 %v425, %v546
    %v581 = vmul.f32 %v425, %v550
    %v582 = vmul.f32 %v425, %v554
    %v583 = vmul.f32 %v425, %v558
    %v584 = vmul.f32 %v425, %v562
    %v585 = vmul.f32 %v425, %v566
    %v586 = vmul.f32 %v425, %v570
    %v587 = vadd.f32 %v407, %v571
    %v588 = vadd.f32 %v408, %v572
    %v589 = vadd.f32 %v409, %v573
    %v590 = vadd.f32 %v410, %v574
    %v591 = vadd.f32 %v411, %v575
    %v592 = vadd.f32 %v412, %v576
    %v593 = vadd.f32 %v413, %v577
    %v594 = vadd.f32 %v414, %v578
    %v595 = vadd.f32 %v415, %v579
    %v596 = vadd.f32 %v416, %v580
    %v597 = vadd.f32 %v417, %v581
    %v598 = vadd.f32 %v418, %v582
    %v599 = vadd.f32 %v419, %v583
    %v600 = vadd.f32 %v420, %v584
    %v601 = vadd.f32 %v421, %v585
    %v602 = vadd.f32 %v422, %v586
    %603 = vset.pattern.permute.xlu0 3
    %604 = vperm.xlu0 %603, %v61
    %v605 = vpop.permute.xlu0 %604
    %v607 = vlaneseq
    %v608 = vshrl.u32 %v607, 7
    %v609 = vsub.s32 3, %v608
    %v610 = vrot.slane %v62, %v609
    %v611 = vlaneseq
    %v612 = vshrl.u32 %v611, 7
    %v613 = vsub.s32 7, %v612
    %v614 = vrot.slane %v62, %v613
    %v615 = vlaneseq
    %v616 = vshrl.u32 %v615, 7
    %v617 = vsub.s32 3, %v616
    %v618 = vrot.slane %v63, %v617
    %v619 = vlaneseq
    %v620 = vshrl.u32 %v619, 7
    %v621 = vsub.s32 7, %v620
    %v622 = vrot.slane %v63, %v621
    %v623 = vlaneseq
    %v624 = vshrl.u32 %v623, 7
    %v625 = vsub.s32 3, %v624
    %v626 = vrot.slane %v64, %v625
    %v627 = vlaneseq
    %v628 = vshrl.u32 %v627, 7
    %v629 = vsub.s32 7, %v628
    %v630 = vrot.slane %v64, %v629
    %v631 = vlaneseq
    %v632 = vshrl.u32 %v631, 7
    %v633 = vsub.s32 3, %v632
    %v634 = vrot.slane %v65, %v633
    %v635 = vlaneseq
    %v636 = vshrl.u32 %v635, 7
    %v637 = vsub.s32 7, %v636
    %v638 = vrot.slane %v65, %v637
    %v639 = vlaneseq
    %v640 = vshrl.u32 %v639, 7
    %v641 = vsub.s32 3, %v640
    %v642 = vrot.slane %v66, %v641
    %v643 = vlaneseq
    %v644 = vshrl.u32 %v643, 7
    %v645 = vsub.s32 7, %v644
    %v646 = vrot.slane %v66, %v645
    %v647 = vlaneseq
    %v648 = vshrl.u32 %v647, 7
    %v649 = vsub.s32 3, %v648
    %v650 = vrot.slane %v67, %v649
    %v651 = vlaneseq
    %v652 = vshrl.u32 %v651, 7
    %v653 = vsub.s32 7, %v652
    %v654 = vrot.slane %v67, %v653
    %v655 = vlaneseq
    %v656 = vshrl.u32 %v655, 7
    %v657 = vsub.s32 3, %v656
    %v658 = vrot.slane %v68, %v657
    %v659 = vlaneseq
    %v660 = vshrl.u32 %v659, 7
    %v661 = vsub.s32 7, %v660
    %v662 = vrot.slane %v68, %v661
    %v663 = vlaneseq
    %v664 = vshrl.u32 %v663, 7
    %v665 = vsub.s32 3, %v664
    %v666 = vrot.slane %v69, %v665
    %v667 = vlaneseq
    %v668 = vshrl.u32 %v667, 7
    %v669 = vsub.s32 7, %v668
    %v670 = vrot.slane %v69, %v669
    %v687 = vlaneseq
    %v688 = vshrl.u32 %v687, 7
    %v689 = vsub.s32 3, %v688
    %v690 = vrot.slane %v610, %v689
    %v691 = vlaneseq
    %v692 = vshrl.u32 %v691, 7
    %v693 = vsub.s32 3, %v692
    %v694 = vrot.slane %v614, %v693
    %v695 = vlaneseq
    %v696 = vshrl.u32 %v695, 7
    %v697 = vsub.s32 3, %v696
    %v698 = vrot.slane %v618, %v697
    %v699 = vlaneseq
    %v700 = vshrl.u32 %v699, 7
    %v701 = vsub.s32 3, %v700
    %v702 = vrot.slane %v622, %v701
    %v703 = vlaneseq
    %v704 = vshrl.u32 %v703, 7
    %v705 = vsub.s32 3, %v704
    %v706 = vrot.slane %v626, %v705
    %v707 = vlaneseq
    %v708 = vshrl.u32 %v707, 7
    %v709 = vsub.s32 3, %v708
    %v710 = vrot.slane %v630, %v709
    %v711 = vlaneseq
    %v712 = vshrl.u32 %v711, 7
    %v713 = vsub.s32 3, %v712
    %v714 = vrot.slane %v634, %v713
    %v715 = vlaneseq
    %v716 = vshrl.u32 %v715, 7
    %v717 = vsub.s32 3, %v716
    %v718 = vrot.slane %v638, %v717
    %v719 = vlaneseq
    %v720 = vshrl.u32 %v719, 7
    %v721 = vsub.s32 3, %v720
    %v722 = vrot.slane %v642, %v721
    %v723 = vlaneseq
    %v724 = vshrl.u32 %v723, 7
    %v725 = vsub.s32 3, %v724
    %v726 = vrot.slane %v646, %v725
    %v727 = vlaneseq
    %v728 = vshrl.u32 %v727, 7
    %v729 = vsub.s32 3, %v728
    %v730 = vrot.slane %v650, %v729
    %v731 = vlaneseq
    %v732 = vshrl.u32 %v731, 7
    %v733 = vsub.s32 3, %v732
    %v734 = vrot.slane %v654, %v733
    %v735 = vlaneseq
    %v736 = vshrl.u32 %v735, 7
    %v737 = vsub.s32 3, %v736
    %v738 = vrot.slane %v658, %v737
    %v739 = vlaneseq
    %v740 = vshrl.u32 %v739, 7
    %v741 = vsub.s32 3, %v740
    %v742 = vrot.slane %v662, %v741
    %v743 = vlaneseq
    %v744 = vshrl.u32 %v743, 7
    %v745 = vsub.s32 3, %v744
    %v746 = vrot.slane %v666, %v745
    %v747 = vlaneseq
    %v748 = vshrl.u32 %v747, 7
    %v749 = vsub.s32 3, %v748
    %v750 = vrot.slane %v670, %v749
    %v751 = vmul.f32 %v605, %v690
    %v752 = vmul.f32 %v605, %v694
    %v753 = vmul.f32 %v605, %v698
    %v754 = vmul.f32 %v605, %v702
    %v755 = vmul.f32 %v605, %v706
    %v756 = vmul.f32 %v605, %v710
    %v757 = vmul.f32 %v605, %v714
    %v758 = vmul.f32 %v605, %v718
    %v759 = vmul.f32 %v605, %v722
    %v760 = vmul.f32 %v605, %v726
    %v761 = vmul.f32 %v605, %v730
    %v762 = vmul.f32 %v605, %v734
    %v763 = vmul.f32 %v605, %v738
    %v764 = vmul.f32 %v605, %v742
    %v765 = vmul.f32 %v605, %v746
    %v766 = vmul.f32 %v605, %v750
    %v767 = vadd.f32 %v587, %v751
    %v768 = vadd.f32 %v588, %v752
    %v769 = vadd.f32 %v589, %v753
    %v770 = vadd.f32 %v590, %v754
    %v771 = vadd.f32 %v591, %v755
    %v772 = vadd.f32 %v592, %v756
    %v773 = vadd.f32 %v593, %v757
    %v774 = vadd.f32 %v594, %v758
    %v775 = vadd.f32 %v595, %v759
    %v776 = vadd.f32 %v596, %v760
    %v777 = vadd.f32 %v597, %v761
    %v778 = vadd.f32 %v598, %v762
    %v779 = vadd.f32 %v599, %v763
    %v780 = vadd.f32 %v600, %v764
    %v781 = vadd.f32 %v601, %v765
    %v782 = vadd.f32 %v602, %v766
    %v783 = vld [vmem:[%s2] sm:$0xff]
    %v784 = vld [vmem:[%s2 + $0x8] sm:$0xff]
    %v787 = vlaneseq
    %v788 = vshrl.u32 %v787, 7
    %v789 = vsub.s32 0, %v788
    %v790 = vrot.slane %v783, %v789
    %v791 = vlaneseq
    %v792 = vshrl.u32 %v791, 7
    %v793 = vsub.s32 1, %v792
    %v794 = vrot.slane %v783, %v793
    %v795 = vlaneseq
    %v796 = vshrl.u32 %v795, 7
    %v797 = vsub.s32 2, %v796
    %v798 = vrot.slane %v783, %v797
    %v799 = vlaneseq
    %v800 = vshrl.u32 %v799, 7
    %v801 = vsub.s32 3, %v800
    %v802 = vrot.slane %v783, %v801
    %v803 = vlaneseq
    %v804 = vshrl.u32 %v803, 7
    %v805 = vsub.s32 4, %v804
    %v806 = vrot.slane %v783, %v805
    %v807 = vlaneseq
    %v808 = vshrl.u32 %v807, 7
    %v809 = vsub.s32 5, %v808
    %v810 = vrot.slane %v783, %v809
    %v811 = vlaneseq
    %v812 = vshrl.u32 %v811, 7
    %v813 = vsub.s32 6, %v812
    %v814 = vrot.slane %v783, %v813
    %v815 = vlaneseq
    %v816 = vshrl.u32 %v815, 7
    %v817 = vsub.s32 7, %v816
    %v818 = vrot.slane %v783, %v817
    %v819 = vlaneseq
    %v820 = vshrl.u32 %v819, 7
    %v821 = vsub.s32 0, %v820
    %v822 = vrot.slane %v784, %v821
    %v823 = vlaneseq
    %v824 = vshrl.u32 %v823, 7
    %v825 = vsub.s32 1, %v824
    %v826 = vrot.slane %v784, %v825
    %v827 = vlaneseq
    %v828 = vshrl.u32 %v827, 7
    %v829 = vsub.s32 2, %v828
    %v830 = vrot.slane %v784, %v829
    %v831 = vlaneseq
    %v832 = vshrl.u32 %v831, 7
    %v833 = vsub.s32 3, %v832
    %v834 = vrot.slane %v784, %v833
    %v835 = vlaneseq
    %v836 = vshrl.u32 %v835, 7
    %v837 = vsub.s32 4, %v836
    %v838 = vrot.slane %v784, %v837
    %v839 = vlaneseq
    %v840 = vshrl.u32 %v839, 7
    %v841 = vsub.s32 5, %v840
    %v842 = vrot.slane %v784, %v841
    %v843 = vlaneseq
    %v844 = vshrl.u32 %v843, 7
    %v845 = vsub.s32 6, %v844
    %v846 = vrot.slane %v784, %v845
    %v847 = vlaneseq
    %v848 = vshrl.u32 %v847, 7
    %v849 = vsub.s32 7, %v848
    %v850 = vrot.slane %v784, %v849
    %v867 = vadd.f32 %v767, %v790
    %v868 = vadd.f32 %v768, %v794
    %v869 = vadd.f32 %v769, %v798
    %v870 = vadd.f32 %v770, %v802
    %v871 = vadd.f32 %v771, %v806
    %v872 = vadd.f32 %v772, %v810
    %v873 = vadd.f32 %v773, %v814
    %v874 = vadd.f32 %v774, %v818
    %v875 = vadd.f32 %v775, %v822
    %v876 = vadd.f32 %v776, %v826
    %v877 = vadd.f32 %v777, %v830
    %v878 = vadd.f32 %v778, %v834
    %v879 = vadd.f32 %v779, %v838
    %v880 = vadd.f32 %v780, %v842
    %v881 = vadd.f32 %v781, %v846
    %v882 = vadd.f32 %v782, %v850
    %v883 = vmax.f32 %v867, 0.0
    %v884 = vmax.f32 %v868, 0.0
    %v885 = vmax.f32 %v869, 0.0
    %v886 = vmax.f32 %v870, 0.0
    %v887 = vmax.f32 %v871, 0.0
    %v888 = vmax.f32 %v872, 0.0
    %v889 = vmax.f32 %v873, 0.0
    %v890 = vmax.f32 %v874, 0.0
    %v891 = vmax.f32 %v875, 0.0
    %v892 = vmax.f32 %v876, 0.0
    %v893 = vmax.f32 %v877, 0.0
    %v894 = vmax.f32 %v878, 0.0
    %v895 = vmax.f32 %v879, 0.0
    %v896 = vmax.f32 %v880, 0.0
    %v897 = vmax.f32 %v881, 0.0
    %v898 = vmax.f32 %v882, 0.0
    %v899 = vld [vmem:[#allocation5] sm:$0xff]
    %v900 = vld [vmem:[#allocation5 + $0x8] sm:$0xff]
    %v901 = vld [vmem:[#allocation5 + $0x10] sm:$0xff]
    %v902 = vld [vmem:[#allocation5 + $0x18] sm:$0xff]
    %v903 = vld [vmem:[#allocation5 + $0x20] sm:$0xff]
    %v904 = vld [vmem:[#allocation5 + $0x28] sm:$0xff]
    %v905 = vld [vmem:[#allocation5 + $0x30] sm:$0xff]
    %v906 = vld [vmem:[#allocation5 + $0x38] sm:$0xff]
    %v907 = vld [vmem:[#allocation5 + $0x40] sm:$0xff]
    %v908 = vld [vmem:[#allocation5 + $0x48] sm:$0xff]
    %v909 = vld [vmem:[#allocation5 + $0x50] sm:$0xff]
    %v910 = vld [vmem:[#allocation5 + $0x58] sm:$0xff]
    %v911 = vld [vmem:[#allocation5 + $0x60] sm:$0xff]
    %v912 = vld [vmem:[#allocation5 + $0x68] sm:$0xff]
    %v913 = vld [vmem:[#allocation5 + $0x70] sm:$0xff]
    %v914 = vld [vmem:[#allocation5 + $0x78] sm:$0xff]
    %v915 = vmul.f32 %v883, %v899
    %v916 = vmul.f32 %v884, %v900
    %v917 = vmul.f32 %v885, %v901
    %v918 = vmul.f32 %v886, %v902
    %v919 = vmul.f32 %v887, %v903
    %v920 = vmul.f32 %v888, %v904
    %v921 = vmul.f32 %v889, %v905
    %v922 = vmul.f32 %v890, %v906
    %v923 = vmul.f32 %v891, %v907
    %v924 = vmul.f32 %v892, %v908
    %v925 = vmul.f32 %v893, %v909
    %v926 = vmul.f32 %v894, %v910
    %v927 = vmul.f32 %v895, %v911
    %v928 = vmul.f32 %v896, %v912
    %v929 = vmul.f32 %v897, %v913
    %v930 = vmul.f32 %v898, %v914
    %v931 = vld [vmem:[#allocation7] sm:$0xff]
    %v932 = vld [vmem:[#allocation7 + $0x8] sm:$0xff]
    %v933 = vld [vmem:[#allocation7 + $0x10] sm:$0xff]
    %v934 = vld [vmem:[#allocation7 + $0x18] sm:$0xff]
    %v935 = vld [vmem:[#allocation7 + $0x20] sm:$0xff]
    %v936 = vld [vmem:[#allocation7 + $0x28] sm:$0xff]
    %v937 = vld [vmem:[#allocation7 + $0x30] sm:$0xff]
    %v938 = vld [vmem:[#allocation7 + $0x38] sm:$0xff]
    %v939 = vld [vmem:[#allocation7 + $0x40] sm:$0xff]
    %v940 = vld [vmem:[#allocation7 + $0x48] sm:$0xff]
    %v941 = vld [vmem:[#allocation7 + $0x50] sm:$0xff]
    %v942 = vld [vmem:[#allocation7 + $0x58] sm:$0xff]
    %v943 = vld [vmem:[#allocation7 + $0x60] sm:$0xff]
    %v944 = vld [vmem:[#allocation7 + $0x68] sm:$0xff]
    %v945 = vld [vmem:[#allocation7 + $0x70] sm:$0xff]
    %v946 = vld [vmem:[#allocation7 + $0x78] sm:$0xff]
    %v947 = vld [vmem:[#allocation7 + $0x80] sm:$0xff]
    %v948 = vld [vmem:[#allocation7 + $0x88] sm:$0xff]
    %v949 = vld [vmem:[#allocation7 + $0x90] sm:$0xff]
    %v950 = vld [vmem:[#allocation7 + $0x98] sm:$0xff]
    %v951 = vld [vmem:[#allocation7 + $0xa0] sm:$0xff]
    %v952 = vld [vmem:[#allocation7 + $0xa8] sm:$0xff]
    %v953 = vld [vmem:[#allocation7 + $0xb0] sm:$0xff]
    %v954 = vld [vmem:[#allocation7 + $0xb8] sm:$0xff]
    %v955 = vld [vmem:[#allocation7 + $0xc0] sm:$0xff]
    %v956 = vld [vmem:[#allocation7 + $0xc8] sm:$0xff]
    %v957 = vld [vmem:[#allocation7 + $0xd0] sm:$0xff]
    %v958 = vld [vmem:[#allocation7 + $0xd8] sm:$0xff]
    %v959 = vld [vmem:[#allocation7 + $0xe0] sm:$0xff]
    %v960 = vld [vmem:[#allocation7 + $0xe8] sm:$0xff]
    %v961 = vld [vmem:[#allocation7 + $0xf0] sm:$0xff]
    %v962 = vld [vmem:[#allocation7 + $0xf8] sm:$0xff]
    %v963 = vld [vmem:[#allocation7 + $0x100] sm:$0xff]
    %v964 = vld [vmem:[#allocation7 + $0x108] sm:$0xff]
    %v965 = vld [vmem:[#allocation7 + $0x110] sm:$0xff]
    %v966 = vld [vmem:[#allocation7 + $0x118] sm:$0xff]
    %v967 = vld [vmem:[#allocation7 + $0x120] sm:$0xff]
    %v968 = vld [vmem:[#allocation7 + $0x128] sm:$0xff]
    %v969 = vld [vmem:[#allocation7 + $0x130] sm:$0xff]
    %v970 = vld [vmem:[#allocation7 + $0x138] sm:$0xff]
    %v971 = vld [vmem:[#allocation7 + $0x140] sm:$0xff]
    %v972 = vld [vmem:[#allocation7 + $0x148] sm:$0xff]
    %v973 = vld [vmem:[#allocation7 + $0x150] sm:$0xff]
    %v974 = vld [vmem:[#allocation7 + $0x158] sm:$0xff]
    %v975 = vld [vmem:[#allocation7 + $0x160] sm:$0xff]
    %v976 = vld [vmem:[#allocation7 + $0x168] sm:$0xff]
    %v977 = vld [vmem:[#allocation7 + $0x170] sm:$0xff]
    %v978 = vld [vmem:[#allocation7 + $0x178] sm:$0xff]
    %v979 = vld [vmem:[#allocation7 + $0x180] sm:$0xff]
    %v980 = vld [vmem:[#allocation7 + $0x188] sm:$0xff]
    %v981 = vld [vmem:[#allocation7 + $0x190] sm:$0xff]
    %v982 = vld [vmem:[#allocation7 + $0x198] sm:$0xff]
    %v983 = vld [vmem:[#allocation7 + $0x1a0] sm:$0xff]
    %v984 = vld [vmem:[#allocation7 + $0x1a8] sm:$0xff]
    %v985 = vld [vmem:[#allocation7 + $0x1b0] sm:$0xff]
    %v986 = vld [vmem:[#allocation7 + $0x1b8] sm:$0xff]
    %v987 = vld [vmem:[#allocation7 + $0x1c0] sm:$0xff]
    %v988 = vld [vmem:[#allocation7 + $0x1c8] sm:$0xff]
    %v989 = vld [vmem:[#allocation7 + $0x1d0] sm:$0xff]
    %v990 = vld [vmem:[#allocation7 + $0x1d8] sm:$0xff]
    %v991 = vld [vmem:[#allocation7 + $0x1e0] sm:$0xff]
    %v992 = vld [vmem:[#allocation7 + $0x1e8] sm:$0xff]
    %v993 = vld [vmem:[#allocation7 + $0x1f0] sm:$0xff]
    %v994 = vld [vmem:[#allocation7 + $0x1f8] sm:$0xff]
    %v995 = vld [vmem:[#allocation7 + $0x200] sm:$0xff]
    %v996 = vld [vmem:[#allocation7 + $0x208] sm:$0xff]
    %v997 = vld [vmem:[#allocation7 + $0x210] sm:$0xff]
    %v998 = vld [vmem:[#allocation7 + $0x218] sm:$0xff]
    %v999 = vld [vmem:[#allocation7 + $0x220] sm:$0xff]
    %v1000 = vld [vmem:[#allocation7 + $0x228] sm:$0xff]
    %v1001 = vld [vmem:[#allocation7 + $0x230] sm:$0xff]
    %v1002 = vld [vmem:[#allocation7 + $0x238] sm:$0xff]
    %v1003 = vld [vmem:[#allocation7 + $0x240] sm:$0xff]
    %v1004 = vld [vmem:[#allocation7 + $0x248] sm:$0xff]
    %v1005 = vld [vmem:[#allocation7 + $0x250] sm:$0xff]
    %v1006 = vld [vmem:[#allocation7 + $0x258] sm:$0xff]
    %v1007 = vld [vmem:[#allocation7 + $0x260] sm:$0xff]
    %v1008 = vld [vmem:[#allocation7 + $0x268] sm:$0xff]
    %v1009 = vld [vmem:[#allocation7 + $0x270] sm:$0xff]
    %v1010 = vld [vmem:[#allocation7 + $0x278] sm:$0xff]
    %v1011 = vld [vmem:[#allocation7 + $0x280] sm:$0xff]
    %v1012 = vld [vmem:[#allocation7 + $0x288] sm:$0xff]
    %v1013 = vld [vmem:[#allocation7 + $0x290] sm:$0xff]
    %v1014 = vld [vmem:[#allocation7 + $0x298] sm:$0xff]
    %v1015 = vld [vmem:[#allocation7 + $0x2a0] sm:$0xff]
    %v1016 = vld [vmem:[#allocation7 + $0x2a8] sm:$0xff]
    %v1017 = vld [vmem:[#allocation7 + $0x2b0] sm:$0xff]
    %v1018 = vld [vmem:[#allocation7 + $0x2b8] sm:$0xff]
    %v1019 = vld [vmem:[#allocation7 + $0x2c0] sm:$0xff]
    %v1020 = vld [vmem:[#allocation7 + $0x2c8] sm:$0xff]
    %v1021 = vld [vmem:[#allocation7 + $0x2d0] sm:$0xff]
    %v1022 = vld [vmem:[#allocation7 + $0x2d8] sm:$0xff]
    %v1023 = vld [vmem:[#allocation7 + $0x2e0] sm:$0xff]
    %v1024 = vld [vmem:[#allocation7 + $0x2e8] sm:$0xff]
    %v1025 = vld [vmem:[#allocation7 + $0x2f0] sm:$0xff]
    %v1026 = vld [vmem:[#allocation7 + $0x2f8] sm:$0xff]
    %v1027 = vld [vmem:[#allocation7 + $0x300] sm:$0xff]
    %v1028 = vld [vmem:[#allocation7 + $0x308] sm:$0xff]
    %v1029 = vld [vmem:[#allocation7 + $0x310] sm:$0xff]
    %v1030 = vld [vmem:[#allocation7 + $0x318] sm:$0xff]
    %v1031 = vld [vmem:[#allocation7 + $0x320] sm:$0xff]
    %v1032 = vld [vmem:[#allocation7 + $0x328] sm:$0xff]
    %v1033 = vld [vmem:[#allocation7 + $0x330] sm:$0xff]
    %v1034 = vld [vmem:[#allocation7 + $0x338] sm:$0xff]
    %v1035 = vld [vmem:[#allocation7 + $0x340] sm:$0xff]
    %v1036 = vld [vmem:[#allocation7 + $0x348] sm:$0xff]
    %v1037 = vld [vmem:[#allocation7 + $0x350] sm:$0xff]
    %v1038 = vld [vmem:[#allocation7 + $0x358] sm:$0xff]
    %v1039 = vld [vmem:[#allocation7 + $0x360] sm:$0xff]
    %v1040 = vld [vmem:[#allocation7 + $0x368] sm:$0xff]
    %v1041 = vld [vmem:[#allocation7 + $0x370] sm:$0xff]
    %v1042 = vld [vmem:[#allocation7 + $0x378] sm:$0xff]
    %v1043 = vld [vmem:[#allocation7 + $0x380] sm:$0xff]
    %v1044 = vld [vmem:[#allocation7 + $0x388] sm:$0xff]
    %v1045 = vld [vmem:[#allocation7 + $0x390] sm:$0xff]
    %v1046 = vld [vmem:[#allocation7 + $0x398] sm:$0xff]
    %v1047 = vld [vmem:[#allocation7 + $0x3a0] sm:$0xff]
    %v1048 = vld [vmem:[#allocation7 + $0x3a8] sm:$0xff]
    %v1049 = vld [vmem:[#allocation7 + $0x3b0] sm:$0xff]
    %v1050 = vld [vmem:[#allocation7 + $0x3b8] sm:$0xff]
    %v1051 = vld [vmem:[#allocation7 + $0x3c0] sm:$0xff]
    %v1052 = vld [vmem:[#allocation7 + $0x3c8] sm:$0xff]
    %v1053 = vld [vmem:[#allocation7 + $0x3d0] sm:$0xff]
    %v1054 = vld [vmem:[#allocation7 + $0x3d8] sm:$0xff]
    %v1055 = vld [vmem:[#allocation7 + $0x3e0] sm:$0xff]
    %v1056 = vld [vmem:[#allocation7 + $0x3e8] sm:$0xff]
    %v1057 = vld [vmem:[#allocation7 + $0x3f0] sm:$0xff]
    %v1058 = vld [vmem:[#allocation7 + $0x3f8] sm:$0xff]
    %v1059 = vld [vmem:[#allocation7 + $0x400] sm:$0xff]
    %v1060 = vld [vmem:[#allocation7 + $0x408] sm:$0xff]
    %v1061 = vld [vmem:[#allocation7 + $0x410] sm:$0xff]
    %v1062 = vld [vmem:[#allocation7 + $0x418] sm:$0xff]
    %v1063 = vld [vmem:[#allocation7 + $0x420] sm:$0xff]
    %v1064 = vld [vmem:[#allocation7 + $0x428] sm:$0xff]
    %v1065 = vld [vmem:[#allocation7 + $0x430] sm:$0xff]
    %v1066 = vld [vmem:[#allocation7 + $0x438] sm:$0xff]
    %v1067 = vld [vmem:[#allocation7 + $0x440] sm:$0xff]
    %v1068 = vld [vmem:[#allocation7 + $0x448] sm:$0xff]
    %v1069 = vld [vmem:[#allocation7 + $0x450] sm:$0xff]
    %v1070 = vld [vmem:[#allocation7 + $0x458] sm:$0xff]
    %v1071 = vld [vmem:[#allocation7 + $0x460] sm:$0xff]
    %v1072 = vld [vmem:[#allocation7 + $0x468] sm:$0xff]
    %v1073 = vld [vmem:[#allocation7 + $0x470] sm:$0xff]
    %v1074 = vld [vmem:[#allocation7 + $0x478] sm:$0xff]
    %v1075 = vld [vmem:[#allocation7 + $0x480] sm:$0xff]
    %v1076 = vld [vmem:[#allocation7 + $0x488] sm:$0xff]
    %v1077 = vld [vmem:[#allocation7 + $0x490] sm:$0xff]
    %v1078 = vld [vmem:[#allocation7 + $0x498] sm:$0xff]
    %v1079 = vld [vmem:[#allocation7 + $0x4a0] sm:$0xff]
    %v1080 = vld [vmem:[#allocation7 + $0x4a8] sm:$0xff]
    %v1081 = vld [vmem:[#allocation7 + $0x4b0] sm:$0xff]
    %v1082 = vld [vmem:[#allocation7 + $0x4b8] sm:$0xff]
    %v1083 = vld [vmem:[#allocation7 + $0x4c0] sm:$0xff]
    %v1084 = vld [vmem:[#allocation7 + $0x4c8] sm:$0xff]
    %v1085 = vld [vmem:[#allocation7 + $0x4d0] sm:$0xff]
    %v1086 = vld [vmem:[#allocation7 + $0x4d8] sm:$0xff]
    %v1087 = vld [vmem:[#allocation7 + $0x4e0] sm:$0xff]
    %v1088 = vld [vmem:[#allocation7 + $0x4e8] sm:$0xff]
    %v1089 = vld [vmem:[#allocation7 + $0x4f0] sm:$0xff]
    %v1090 = vld [vmem:[#allocation7 + $0x4f8] sm:$0xff]
    %v1091 = vld [vmem:[#allocation7 + $0x500] sm:$0xff]
    %v1092 = vld [vmem:[#allocation7 + $0x508] sm:$0xff]
    %v1093 = vld [vmem:[#allocation7 + $0x510] sm:$0xff]
    %v1094 = vld [vmem:[#allocation7 + $0x518] sm:$0xff]
    %v1095 = vld [vmem:[#allocation7 + $0x520] sm:$0xff]
    %v1096 = vld [vmem:[#allocation7 + $0x528] sm:$0xff]
    %v1097 = vld [vmem:[#allocation7 + $0x530] sm:$0xff]
    %v1098 = vld [vmem:[#allocation7 + $0x538] sm:$0xff]
    %v1099 = vld [vmem:[#allocation7 + $0x540] sm:$0xff]
    %v1100 = vld [vmem:[#allocation7 + $0x548] sm:$0xff]
    %v1101 = vld [vmem:[#allocation7 + $0x550] sm:$0xff]
    %v1102 = vld [vmem:[#allocation7 + $0x558] sm:$0xff]
    %v1103 = vld [vmem:[#allocation7 + $0x560] sm:$0xff]
    %v1104 = vld [vmem:[#allocation7 + $0x568] sm:$0xff]
    %v1105 = vld [vmem:[#allocation7 + $0x570] sm:$0xff]
    %v1106 = vld [vmem:[#allocation7 + $0x578] sm:$0xff]
    %v1107 = vld [vmem:[#allocation7 + $0x580] sm:$0xff]
    %v1108 = vld [vmem:[#allocation7 + $0x588] sm:$0xff]
    %v1109 = vld [vmem:[#allocation7 + $0x590] sm:$0xff]
    %v1110 = vld [vmem:[#allocation7 + $0x598] sm:$0xff]
    %v1111 = vld [vmem:[#allocation7 + $0x5a0] sm:$0xff]
    %v1112 = vld [vmem:[#allocation7 + $0x5a8] sm:$0xff]
    %v1113 = vld [vmem:[#allocation7 + $0x5b0] sm:$0xff]
    %v1114 = vld [vmem:[#allocation7 + $0x5b8] sm:$0xff]
    %v1115 = vld [vmem:[#allocation7 + $0x5c0] sm:$0xff]
    %v1116 = vld [vmem:[#allocation7 + $0x5c8] sm:$0xff]
    %v1117 = vld [vmem:[#allocation7 + $0x5d0] sm:$0xff]
    %v1118 = vld [vmem:[#allocation7 + $0x5d8] sm:$0xff]
    %v1119 = vld [vmem:[#allocation7 + $0x5e0] sm:$0xff]
    %v1120 = vld [vmem:[#allocation7 + $0x5e8] sm:$0xff]
    %v1121 = vld [vmem:[#allocation7 + $0x5f0] sm:$0xff]
    %v1122 = vld [vmem:[#allocation7 + $0x5f8] sm:$0xff]
    %v1123 = vld [vmem:[#allocation7 + $0x600] sm:$0xff]
    %v1124 = vld [vmem:[#allocation7 + $0x608] sm:$0xff]
    %v1125 = vld [vmem:[#allocation7 + $0x610] sm:$0xff]
    %v1126 = vld [vmem:[#allocation7 + $0x618] sm:$0xff]
    %v1127 = vld [vmem:[#allocation7 + $0x620] sm:$0xff]
    %v1128 = vld [vmem:[#allocation7 + $0x628] sm:$0xff]
    %v1129 = vld [vmem:[#allocation7 + $0x630] sm:$0xff]
    %v1130 = vld [vmem:[#allocation7 + $0x638] sm:$0xff]
    %v1131 = vld [vmem:[#allocation7 + $0x640] sm:$0xff]
    %v1132 = vld [vmem:[#allocation7 + $0x648] sm:$0xff]
    %v1133 = vld [vmem:[#allocation7 + $0x650] sm:$0xff]
    %v1134 = vld [vmem:[#allocation7 + $0x658] sm:$0xff]
    %v1135 = vld [vmem:[#allocation7 + $0x660] sm:$0xff]
    %v1136 = vld [vmem:[#allocation7 + $0x668] sm:$0xff]
    %v1137 = vld [vmem:[#allocation7 + $0x670] sm:$0xff]
    %v1138 = vld [vmem:[#allocation7 + $0x678] sm:$0xff]
    %v1139 = vld [vmem:[#allocation7 + $0x680] sm:$0xff]
    %v1140 = vld [vmem:[#allocation7 + $0x688] sm:$0xff]
    %v1141 = vld [vmem:[#allocation7 + $0x690] sm:$0xff]
    %v1142 = vld [vmem:[#allocation7 + $0x698] sm:$0xff]
    %v1143 = vld [vmem:[#allocation7 + $0x6a0] sm:$0xff]
    %v1144 = vld [vmem:[#allocation7 + $0x6a8] sm:$0xff]
    %v1145 = vld [vmem:[#allocation7 + $0x6b0] sm:$0xff]
    %v1146 = vld [vmem:[#allocation7 + $0x6b8] sm:$0xff]
    %v1147 = vld [vmem:[#allocation7 + $0x6c0] sm:$0xff]
    %v1148 = vld [vmem:[#allocation7 + $0x6c8] sm:$0xff]
    %v1149 = vld [vmem:[#allocation7 + $0x6d0] sm:$0xff]
    %v1150 = vld [vmem:[#allocation7 + $0x6d8] sm:$0xff]
    %v1151 = vld [vmem:[#allocation7 + $0x6e0] sm:$0xff]
    %v1152 = vld [vmem:[#allocation7 + $0x6e8] sm:$0xff]
    %v1153 = vld [vmem:[#allocation7 + $0x6f0] sm:$0xff]
    %v1154 = vld [vmem:[#allocation7 + $0x6f8] sm:$0xff]
    %v1155 = vld [vmem:[#allocation7 + $0x700] sm:$0xff]
    %v1156 = vld [vmem:[#allocation7 + $0x708] sm:$0xff]
    %v1157 = vld [vmem:[#allocation7 + $0x710] sm:$0xff]
    %v1158 = vld [vmem:[#allocation7 + $0x718] sm:$0xff]
    %v1159 = vld [vmem:[#allocation7 + $0x720] sm:$0xff]
    %v1160 = vld [vmem:[#allocation7 + $0x728] sm:$0xff]
    %v1161 = vld [vmem:[#allocation7 + $0x730] sm:$0xff]
    %v1162 = vld [vmem:[#allocation7 + $0x738] sm:$0xff]
    %v1163 = vld [vmem:[#allocation7 + $0x740] sm:$0xff]
    %v1164 = vld [vmem:[#allocation7 + $0x748] sm:$0xff]
    %v1165 = vld [vmem:[#allocation7 + $0x750] sm:$0xff]
    %v1166 = vld [vmem:[#allocation7 + $0x758] sm:$0xff]
    %v1167 = vld [vmem:[#allocation7 + $0x760] sm:$0xff]
    %v1168 = vld [vmem:[#allocation7 + $0x768] sm:$0xff]
    %v1169 = vld [vmem:[#allocation7 + $0x770] sm:$0xff]
    %v1170 = vld [vmem:[#allocation7 + $0x778] sm:$0xff]
    %v1171 = vld [vmem:[#allocation7 + $0x780] sm:$0xff]
    %v1172 = vld [vmem:[#allocation7 + $0x788] sm:$0xff]
    %v1173 = vld [vmem:[#allocation7 + $0x790] sm:$0xff]
    %v1174 = vld [vmem:[#allocation7 + $0x798] sm:$0xff]
    %v1175 = vld [vmem:[#allocation7 + $0x7a0] sm:$0xff]
    %v1176 = vld [vmem:[#allocation7 + $0x7a8] sm:$0xff]
    %v1177 = vld [vmem:[#allocation7 + $0x7b0] sm:$0xff]
    %v1178 = vld [vmem:[#allocation7 + $0x7b8] sm:$0xff]
    %v1179 = vld [vmem:[#allocation7 + $0x7c0] sm:$0xff]
    %v1180 = vld [vmem:[#allocation7 + $0x7c8] sm:$0xff]
    %v1181 = vld [vmem:[#allocation7 + $0x7d0] sm:$0xff]
    %v1182 = vld [vmem:[#allocation7 + $0x7d8] sm:$0xff]
    %v1183 = vld [vmem:[#allocation7 + $0x7e0] sm:$0xff]
    %v1184 = vld [vmem:[#allocation7 + $0x7e8] sm:$0xff]
    %v1185 = vld [vmem:[#allocation7 + $0x7f0] sm:$0xff]
    %v1186 = vld [vmem:[#allocation7 + $0x7f8] sm:$0xff]
    %v1187 = vld [vmem:[%s5] sm:$0x1]
    %v1189 = vlaneseq
    %v1190 = vshrl.u32 %v1189, 7
    %v1191 = vsub.s32 0, %v1190
    %v1192 = vrot.slane %v1187, %v1191
    %1194 = vmatprep.subr.mxu0 0.0
    %1195 = vmatpush1.msra.mxu0 %v931
    %1196 = vmatprep.subr.mxu0 0.0
    %1197 = vmatpush1.msra.mxu0 %v932
    %1198 = vmatprep.subr.mxu0 0.0
    %1199 = vmatpush1.msra.mxu0 %v933
    %1200 = vmatprep.subr.mxu0 0.0
    %1201 = vmatpush1.msra.mxu0 %v934
    %1202 = vmatprep.subr.mxu0 0.0
    %1203 = vmatpush1.msra.mxu0 %v935
    %1204 = vmatprep.subr.mxu0 0.0
    %1205 = vmatpush1.msra.mxu0 %v936
    %1206 = vmatprep.subr.mxu0 0.0
    %1207 = vmatpush1.msra.mxu0 %v937
    %1208 = vmatprep.subr.mxu0 0.0
    %1209 = vmatpush1.msra.mxu0 %v938
    %1210 = vmatprep.subr.mxu0 0.0
    %1211 = vmatpush1.msra.mxu0 %v939
    %1212 = vmatprep.subr.mxu0 0.0
    %1213 = vmatpush1.msra.mxu0 %v940
    %1214 = vmatprep.subr.mxu0 0.0
    %1215 = vmatpush1.msra.mxu0 %v941
    %1216 = vmatprep.subr.mxu0 0.0
    %1217 = vmatpush1.msra.mxu0 %v942
    %1218 = vmatprep.subr.mxu0 0.0
    %1219 = vmatpush1.msra.mxu0 %v943
    %1220 = vmatprep.subr.mxu0 0.0
    %1221 = vmatpush1.msra.mxu0 %v944
    %1222 = vmatprep.subr.mxu0 0.0
    %1223 = vmatpush1.msra.mxu0 %v945
    %1224 = vmatprep.subr.mxu0 0.0
    %1225 = vmatpush1.msra.mxu0 %v946
    %1226 = vmatprep.subr.mxu0 0.0
    %1227 = vmatpush1.msra.mxu0 %v947
    %1228 = vmatprep.subr.mxu0 0.0
    %1229 = vmatpush1.msra.mxu0 %v948
    %1230 = vmatprep.subr.mxu0 0.0
    %1231 = vmatpush1.msra.mxu0 %v949
    %1232 = vmatprep.subr.mxu0 0.0
    %1233 = vmatpush1.msra.mxu0 %v950
    %1234 = vmatprep.subr.mxu0 0.0
    %1235 = vmatpush1.msra.mxu0 %v951
    %1236 = vmatprep.subr.mxu0 0.0
    %1237 = vmatpush1.msra.mxu0 %v952
    %1238 = vmatprep.subr.mxu0 0.0
    %1239 = vmatpush1.msra.mxu0 %v953
    %1240 = vmatprep.subr.mxu0 0.0
    %1241 = vmatpush1.msra.mxu0 %v954
    %1242 = vmatprep.subr.mxu0 0.0
    %1243 = vmatpush1.msra.mxu0 %v955
    %1244 = vmatprep.subr.mxu0 0.0
    %1245 = vmatpush1.msra.mxu0 %v956
    %1246 = vmatprep.subr.mxu0 0.0
    %1247 = vmatpush1.msra.mxu0 %v957
    %1248 = vmatprep.subr.mxu0 0.0
    %1249 = vmatpush1.msra.mxu0 %v958
    %1250 = vmatprep.subr.mxu0 0.0
    %1251 = vmatpush1.msra.mxu0 %v959
    %1252 = vmatprep.subr.mxu0 0.0
    %1253 = vmatpush1.msra.mxu0 %v960
    %1254 = vmatprep.subr.mxu0 0.0
    %1255 = vmatpush1.msra.mxu0 %v961
    %1256 = vmatprep.subr.mxu0 0.0
    %1257 = vmatpush1.msra.mxu0 %v962
    %1258 = vmatprep.mubr.f32.mxu0 %v916
    %1259 = vmatmul.mubr.f32.gmra.mrb[0].mxu0 %v915
    %v1260 = vpop.f32.mrb[0].mxu0
    %v1261 = vadd.f32 %v1192, %v1260
    %v1262 = vpop.f32.mrb[0].mxu0
    %1263 = vdwg.mxu0
    %1264 = vmatprep.subr.mxu0 0.0
    %1265 = vmatpush1.msra.mxu0 %v963
    %1266 = vmatprep.subr.mxu0 0.0
    %1267 = vmatpush1.msra.mxu0 %v964
    %1268 = vmatprep.subr.mxu0 0.0
    %1269 = vmatpush1.msra.mxu0 %v965
    %1270 = vmatprep.subr.mxu0 0.0
    %1271 = vmatpush1.msra.mxu0 %v966
    %1272 = vmatprep.subr.mxu0 0.0
    %1273 = vmatpush1.msra.mxu0 %v967
    %1274 = vmatprep.subr.mxu0 0.0
    %1275 = vmatpush1.msra.mxu0 %v968
    %1276 = vmatprep.subr.mxu0 0.0
    %1277 = vmatpush1.msra.mxu0 %v969
    %1278 = vmatprep.subr.mxu0 0.0
    %1279 = vmatpush1.msra.mxu0 %v970
    %1280 = vmatprep.subr.mxu0 0.0
    %1281 = vmatpush1.msra.mxu0 %v971
    %1282 = vmatprep.subr.mxu0 0.0
    %1283 = vmatpush1.msra.mxu0 %v972
    %1284 = vmatprep.subr.mxu0 0.0
    %1285 = vmatpush1.msra.mxu0 %v973
    %1286 = vmatprep.subr.mxu0 0.0
    %1287 = vmatpush1.msra.mxu0 %v974
    %1288 = vmatprep.subr.mxu0 0.0
    %1289 = vmatpush1.msra.mxu0 %v975
    %1290 = vmatprep.subr.mxu0 0.0
    %1291 = vmatpush1.msra.mxu0 %v976
    %1292 = vmatprep.subr.mxu0 0.0
    %1293 = vmatpush1.msra.mxu0 %v977
    %1294 = vmatprep.subr.mxu0 0.0
    %1295 = vmatpush1.msra.mxu0 %v978
    %1296 = vmatprep.subr.mxu0 0.0
    %1297 = vmatpush1.msra.mxu0 %v979
    %1298 = vmatprep.subr.mxu0 0.0
    %1299 = vmatpush1.msra.mxu0 %v980
    %1300 = vmatprep.subr.mxu0 0.0
    %1301 = vmatpush1.msra.mxu0 %v981
    %1302 = vmatprep.subr.mxu0 0.0
    %1303 = vmatpush1.msra.mxu0 %v982
    %1304 = vmatprep.subr.mxu0 0.0
    %1305 = vmatpush1.msra.mxu0 %v983
    %1306 = vmatprep.subr.mxu0 0.0
    %1307 = vmatpush1.msra.mxu0 %v984
    %1308 = vmatprep.subr.mxu0 0.0
    %1309 = vmatpush1.msra.mxu0 %v985
    %1310 = vmatprep.subr.mxu0 0.0
    %1311 = vmatpush1.msra.mxu0 %v986
    %1312 = vmatprep.subr.mxu0 0.0
    %1313 = vmatpush1.msra.mxu0 %v987
    %1314 = vmatprep.subr.mxu0 0.0
    %1315 = vmatpush1.msra.mxu0 %v988
    %1316 = vmatprep.subr.mxu0 0.0
    %1317 = vmatpush1.msra.mxu0 %v989
    %1318 = vmatprep.subr.mxu0 0.0
    %1319 = vmatpush1.msra.mxu0 %v990
    %1320 = vmatprep.subr.mxu0 0.0
    %1321 = vmatpush1.msra.mxu0 %v991
    %1322 = vmatprep.subr.mxu0 0.0
    %1323 = vmatpush1.msra.mxu0 %v992
    %1324 = vmatprep.subr.mxu0 0.0
    %1325 = vmatpush1.msra.mxu0 %v993
    %1326 = vmatprep.subr.mxu0 0.0
    %1327 = vmatpush1.msra.mxu0 %v994
    %1328 = vmatprep.mubr.f32.mxu0 %v918
    %1329 = vmatmul.mubr.f32.gmra.mrb[0].mxu0 %v917
    %v1330 = vpop.f32.mrb[0].mxu0
    %v1331 = vadd.f32 %v1261, %v1330
    %v1332 = vpop.f32.mrb[0].mxu0
    %1333 = vdwg.mxu0
    %1334 = vmatprep.subr.mxu0 0.0
    %1335 = vmatpush1.msra.mxu0 %v995
    %1336 = vmatprep.subr.mxu0 0.0
    %1337 = vmatpush1.msra.mxu0 %v996
    %1338 = vmatprep.subr.mxu0 0.0
    %1339 = vmatpush1.msra.mxu0 %v997
    %1340 = vmatprep.subr.mxu0 0.0
    %1341 = vmatpush1.msra.mxu0 %v998
    %1342 = vmatprep.subr.mxu0 0.0
    %1343 = vmatpush1.msra.mxu0 %v999
    %1344 = vmatprep.subr.mxu0 0.0
    %1345 = vmatpush1.msra.mxu0 %v1000
    %1346 = vmatprep.subr.mxu0 0.0
    %1347 = vmatpush1.msra.mxu0 %v1001
    %1348 = vmatprep.subr.mxu0 0.0
    %1349 = vmatpush1.msra.mxu0 %v1002
    %1350 = vmatprep.subr.mxu0 0.0
    %1351 = vmatpush1.msra.mxu0 %v1003
    %1352 = vmatprep.subr.mxu0 0.0
    %1353 = vmatpush1.msra.mxu0 %v1004
    %1354 = vmatprep.subr.mxu0 0.0
    %1355 = vmatpush1.msra.mxu0 %v1005
    %1356 = vmatprep.subr.mxu0 0.0
    %1357 = vmatpush1.msra.mxu0 %v1006
    %1358 = vmatprep.subr.mxu0 0.0
    %1359 = vmatpush1.msra.mxu0 %v1007
    %1360 = vmatprep.subr.mxu0 0.0
    %1361 = vmatpush1.msra.mxu0 %v1008
    %1362 = vmatprep.subr.mxu0 0.0
    %1363 = vmatpush1.msra.mxu0 %v1009
    %1364 = vmatprep.subr.mxu0 0.0
    %1365 = vmatpush1.msra.mxu0 %v1010
    %1366 = vmatprep.subr.mxu0 0.0
    %1367 = vmatpush1.msra.mxu0 %v1011
    %1368 = vmatprep.subr.mxu0 0.0
    %1369 = vmatpush1.msra.mxu0 %v1012
    %1370 = vmatprep.subr.mxu0 0.0
    %1371 = vmatpush1.msra.mxu0 %v1013
    %1372 = vmatprep.subr.mxu0 0.0
    %1373 = vmatpush1.msra.mxu0 %v1014
    %1374 = vmatprep.subr.mxu0 0.0
    %1375 = vmatpush1.msra.mxu0 %v1015
    %1376 = vmatprep.subr.mxu0 0.0
    %1377 = vmatpush1.msra.mxu0 %v1016
    %1378 = vmatprep.subr.mxu0 0.0
    %1379 = vmatpush1.msra.mxu0 %v1017
    %1380 = vmatprep.subr.mxu0 0.0
    %1381 = vmatpush1.msra.mxu0 %v1018
    %1382 = vmatprep.subr.mxu0 0.0
    %1383 = vmatpush1.msra.mxu0 %v1019
    %1384 = vmatprep.subr.mxu0 0.0
    %1385 = vmatpush1.msra.mxu0 %v1020
    %1386 = vmatprep.subr.mxu0 0.0
    %1387 = vmatpush1.msra.mxu0 %v1021
    %1388 = vmatprep.subr.mxu0 0.0
    %1389 = vmatpush1.msra.mxu0 %v1022
    %1390 = vmatprep.subr.mxu0 0.0
    %1391 = vmatpush1.msra.mxu0 %v1023
    %1392 = vmatprep.subr.mxu0 0.0
    %1393 = vmatpush1.msra.mxu0 %v1024
    %1394 = vmatprep.subr.mxu0 0.0
    %1395 = vmatpush1.msra.mxu0 %v1025
    %1396 = vmatprep.subr.mxu0 0.0
    %1397 = vmatpush1.msra.mxu0 %v1026
    %1398 = vmatprep.mubr.f32.mxu0 %v920
    %1399 = vmatmul.mubr.f32.gmra.mrb[0].mxu0 %v919
    %v1400 = vpop.f32.mrb[0].mxu0
    %v1401 = vadd.f32 %v1331, %v1400
    %v1402 = vpop.f32.mrb[0].mxu0
    %1403 = vdwg.mxu0
    %1404 = vmatprep.subr.mxu0 0.0
    %1405 = vmatpush1.msra.mxu0 %v1027
    %1406 = vmatprep.subr.mxu0 0.0
    %1407 = vmatpush1.msra.mxu0 %v1028
    %1408 = vmatprep.subr.mxu0 0.0
    %1409 = vmatpush1.msra.mxu0 %v1029
    %1410 = vmatprep.subr.mxu0 0.0
    %1411 = vmatpush1.msra.mxu0 %v1030
    %1412 = vmatprep.subr.mxu0 0.0
    %1413 = vmatpush1.msra.mxu0 %v1031
    %1414 = vmatprep.subr.mxu0 0.0
    %1415 = vmatpush1.msra.mxu0 %v1032
    %1416 = vmatprep.subr.mxu0 0.0
    %1417 = vmatpush1.msra.mxu0 %v1033
    %1418 = vmatprep.subr.mxu0 0.0
    %1419 = vmatpush1.msra.mxu0 %v1034
    %1420 = vmatprep.subr.mxu0 0.0
    %1421 = vmatpush1.msra.mxu0 %v1035
    %1422 = vmatprep.subr.mxu0 0.0
    %1423 = vmatpush1.msra.mxu0 %v1036
    %1424 = vmatprep.subr.mxu0 0.0
    %1425 = vmatpush1.msra.mxu0 %v1037
    %1426 = vmatprep.subr.mxu0 0.0
    %1427 = vmatpush1.msra.mxu0 %v1038
    %1428 = vmatprep.subr.mxu0 0.0
    %1429 = vmatpush1.msra.mxu0 %v1039
    %1430 = vmatprep.subr.mxu0 0.0
    %1431 = vmatpush1.msra.mxu0 %v1040
    %1432 = vmatprep.subr.mxu0 0.0
    %1433 = vmatpush1.msra.mxu0 %v1041
    %1434 = vmatprep.subr.mxu0 0.0
    %1435 = vmatpush1.msra.mxu0 %v1042
    %1436 = vmatprep.subr.mxu0 0.0
    %1437 = vmatpush1.msra.mxu0 %v1043
    %1438 = vmatprep.subr.mxu0 0.0
    %1439 = vmatpush1.msra.mxu0 %v1044
    %1440 = vmatprep.subr.mxu0 0.0
    %1441 = vmatpush1.msra.mxu0 %v1045
    %1442 = vmatprep.subr.mxu0 0.0
    %1443 = vmatpush1.msra.mxu0 %v1046
    %1444 = vmatprep.subr.mxu0 0.0
    %1445 = vmatpush1.msra.mxu0 %v1047
    %1446 = vmatprep.subr.mxu0 0.0
    %1447 = vmatpush1.msra.mxu0 %v1048
    %1448 = vmatprep.subr.mxu0 0.0
    %1449 = vmatpush1.msra.mxu0 %v1049
    %1450 = vmatprep.subr.mxu0 0.0
    %1451 = vmatpush1.msra.mxu0 %v1050
    %1452 = vmatprep.subr.mxu0 0.0
    %1453 = vmatpush1.msra.mxu0 %v1051
    %1454 = vmatprep.subr.mxu0 0.0
    %1455 = vmatpush1.msra.mxu0 %v1052
    %1456 = vmatprep.subr.mxu0 0.0
    %1457 = vmatpush1.msra.mxu0 %v1053
    %1458 = vmatprep.subr.mxu0 0.0
    %1459 = vmatpush1.msra.mxu0 %v1054
    %1460 = vmatprep.subr.mxu0 0.0
    %1461 = vmatpush1.msra.mxu0 %v1055
    %1462 = vmatprep.subr.mxu0 0.0
    %1463 = vmatpush1.msra.mxu0 %v1056
    %1464 = vmatprep.subr.mxu0 0.0
    %1465 = vmatpush1.msra.mxu0 %v1057
    %1466 = vmatprep.subr.mxu0 0.0
    %1467 = vmatpush1.msra.mxu0 %v1058
    %1468 = vmatprep.mubr.f32.mxu0 %v922
    %1469 = vmatmul.mubr.f32.gmra.mrb[0].mxu0 %v921
    %v1470 = vpop.f32.mrb[0].mxu0
    %v1471 = vadd.f32 %v1401, %v1470
    %v1472 = vpop.f32.mrb[0].mxu0
    %1473 = vdwg.mxu0
    %1474 = vmatprep.subr.mxu0 0.0
    %1475 = vmatpush1.msra.mxu0 %v1059
    %1476 = vmatprep.subr.mxu0 0.0
    %1477 = vmatpush1.msra.mxu0 %v1060
    %1478 = vmatprep.subr.mxu0 0.0
    %1479 = vmatpush1.msra.mxu0 %v1061
    %1480 = vmatprep.subr.mxu0 0.0
    %1481 = vmatpush1.msra.mxu0 %v1062
    %1482 = vmatprep.subr.mxu0 0.0
    %1483 = vmatpush1.msra.mxu0 %v1063
    %1484 = vmatprep.subr.mxu0 0.0
    %1485 = vmatpush1.msra.mxu0 %v1064
    %1486 = vmatprep.subr.mxu0 0.0
    %1487 = vmatpush1.msra.mxu0 %v1065
    %1488 = vmatprep.subr.mxu0 0.0
    %1489 = vmatpush1.msra.mxu0 %v1066
    %1490 = vmatprep.subr.mxu0 0.0
    %1491 = vmatpush1.msra.mxu0 %v1067
    %1492 = vmatprep.subr.mxu0 0.0
    %1493 = vmatpush1.msra.mxu0 %v1068
    %1494 = vmatprep.subr.mxu0 0.0
    %1495 = vmatpush1.msra.mxu0 %v1069
    %1496 = vmatprep.subr.mxu0 0.0
    %1497 = vmatpush1.msra.mxu0 %v1070
    %1498 = vmatprep.subr.mxu0 0.0
    %1499 = vmatpush1.msra.mxu0 %v1071
    %1500 = vmatprep.subr.mxu0 0.0
    %1501 = vmatpush1.msra.mxu0 %v1072
    %1502 = vmatprep.subr.mxu0 0.0
    %1503 = vmatpush1.msra.mxu0 %v1073
    %1504 = vmatprep.subr.mxu0 0.0
    %1505 = vmatpush1.msra.mxu0 %v1074
    %1506 = vmatprep.subr.mxu0 0.0
    %1507 = vmatpush1.msra.mxu0 %v1075
    %1508 = vmatprep.subr.mxu0 0.0
    %1509 = vmatpush1.msra.mxu0 %v1076
    %1510 = vmatprep.subr.mxu0 0.0
    %1511 = vmatpush1.msra.mxu0 %v1077
    %1512 = vmatprep.subr.mxu0 0.0
    %1513 = vmatpush1.msra.mxu0 %v1078
    %1514 = vmatprep.subr.mxu0 0.0
    %1515 = vmatpush1.msra.mxu0 %v1079
    %1516 = vmatprep.subr.mxu0 0.0
    %1517 = vmatpush1.msra.mxu0 %v1080
    %1518 = vmatprep.subr.mxu0 0.0
    %1519 = vmatpush1.msra.mxu0 %v1081
    %1520 = vmatprep.subr.mxu0 0.0
    %1521 = vmatpush1.msra.mxu0 %v1082
    %1522 = vmatprep.subr.mxu0 0.0
    %1523 = vmatpush1.msra.mxu0 %v1083
    %1524 = vmatprep.subr.mxu0 0.0
    %1525 = vmatpush1.msra.mxu0 %v1084
    %1526 = vmatprep.subr.mxu0 0.0
    %1527 = vmatpush1.msra.mxu0 %v1085
    %1528 = vmatprep.subr.mxu0 0.0
    %1529 = vmatpush1.msra.mxu0 %v1086
    %1530 = vmatprep.subr.mxu0 0.0
    %1531 = vmatpush1.msra.mxu0 %v1087
    %1532 = vmatprep.subr.mxu0 0.0
    %1533 = vmatpush1.msra.mxu0 %v1088
    %1534 = vmatprep.subr.mxu0 0.0
    %1535 = vmatpush1.msra.mxu0 %v1089
    %1536 = vmatprep.subr.mxu0 0.0
    %1537 = vmatpush1.msra.mxu0 %v1090
    %1538 = vmatprep.mubr.f32.mxu0 %v924
    %1539 = vmatmul.mubr.f32.gmra.mrb[0].mxu0 %v923
    %v1540 = vpop.f32.mrb[0].mxu0
    %v1541 = vadd.f32 %v1471, %v1540
    %v1542 = vpop.f32.mrb[0].mxu0
    %1543 = vdwg.mxu0
    %1544 = vmatprep.subr.mxu0 0.0
    %1545 = vmatpush1.msra.mxu0 %v1091
    %1546 = vmatprep.subr.mxu0 0.0
    %1547 = vmatpush1.msra.mxu0 %v1092
    %1548 = vmatprep.subr.mxu0 0.0
    %1549 = vmatpush1.msra.mxu0 %v1093
    %1550 = vmatprep.subr.mxu0 0.0
    %1551 = vmatpush1.msra.mxu0 %v1094
    %1552 = vmatprep.subr.mxu0 0.0
    %1553 = vmatpush1.msra.mxu0 %v1095
    %1554 = vmatprep.subr.mxu0 0.0
    %1555 = vmatpush1.msra.mxu0 %v1096
    %1556 = vmatprep.subr.mxu0 0.0
    %1557 = vmatpush1.msra.mxu0 %v1097
    %1558 = vmatprep.subr.mxu0 0.0
    %1559 = vmatpush1.msra.mxu0 %v1098
    %1560 = vmatprep.subr.mxu0 0.0
    %1561 = vmatpush1.msra.mxu0 %v1099
    %1562 = vmatprep.subr.mxu0 0.0
    %1563 = vmatpush1.msra.mxu0 %v1100
    %1564 = vmatprep.subr.mxu0 0.0
    %1565 = vmatpush1.msra.mxu0 %v1101
    %1566 = vmatprep.subr.mxu0 0.0
    %1567 = vmatpush1.msra.mxu0 %v1102
    %1568 = vmatprep.subr.mxu0 0.0
    %1569 = vmatpush1.msra.mxu0 %v1103
    %1570 = vmatprep.subr.mxu0 0.0
    %1571 = vmatpush1.msra.mxu0 %v1104
    %1572 = vmatprep.subr.mxu0 0.0
    %1573 = vmatpush1.msra.mxu0 %v1105
    %1574 = vmatprep.subr.mxu0 0.0
    %1575 = vmatpush1.msra.mxu0 %v1106
    %1576 = vmatprep.subr.mxu0 0.0
    %1577 = vmatpush1.msra.mxu0 %v1107
    %1578 = vmatprep.subr.mxu0 0.0
    %1579 = vmatpush1.msra.mxu0 %v1108
    %1580 = vmatprep.subr.mxu0 0.0
    %1581 = vmatpush1.msra.mxu0 %v1109
    %1582 = vmatprep.subr.mxu0 0.0
    %1583 = vmatpush1.msra.mxu0 %v1110
    %1584 = vmatprep.subr.mxu0 0.0
    %1585 = vmatpush1.msra.mxu0 %v1111
    %1586 = vmatprep.subr.mxu0 0.0
    %1587 = vmatpush1.msra.mxu0 %v1112
    %1588 = vmatprep.subr.mxu0 0.0
    %1589 = vmatpush1.msra.mxu0 %v1113
    %1590 = vmatprep.subr.mxu0 0.0
    %1591 = vmatpush1.msra.mxu0 %v1114
    %1592 = vmatprep.subr.mxu0 0.0
    %1593 = vmatpush1.msra.mxu0 %v1115
    %1594 = vmatprep.subr.mxu0 0.0
    %1595 = vmatpush1.msra.mxu0 %v1116
    %1596 = vmatprep.subr.mxu0 0.0
    %1597 = vmatpush1.msra.mxu0 %v1117
    %1598 = vmatprep.subr.mxu0 0.0
    %1599 = vmatpush1.msra.mxu0 %v1118
    %1600 = vmatprep.subr.mxu0 0.0
    %1601 = vmatpush1.msra.mxu0 %v1119
    %1602 = vmatprep.subr.mxu0 0.0
    %1603 = vmatpush1.msra.mxu0 %v1120
    %1604 = vmatprep.subr.mxu0 0.0
    %1605 = vmatpush1.msra.mxu0 %v1121
    %1606 = vmatprep.subr.mxu0 0.0
    %1607 = vmatpush1.msra.mxu0 %v1122
    %1608 = vmatprep.mubr.f32.mxu0 %v926
    %1609 = vmatmul.mubr.f32.gmra.mrb[0].mxu0 %v925
    %v1610 = vpop.f32.mrb[0].mxu0
    %v1611 = vadd.f32 %v1541, %v1610
    %v1612 = vpop.f32.mrb[0].mxu0
    %1613 = vdwg.mxu0
    %1614 = vmatprep.subr.mxu0 0.0
    %1615 = vmatpush1.msra.mxu0 %v1123
    %1616 = vmatprep.subr.mxu0 0.0
    %1617 = vmatpush1.msra.mxu0 %v1124
    %1618 = vmatprep.subr.mxu0 0.0
    %1619 = vmatpush1.msra.mxu0 %v1125
    %1620 = vmatprep.subr.mxu0 0.0
    %1621 = vmatpush1.msra.mxu0 %v1126
    %1622 = vmatprep.subr.mxu0 0.0
    %1623 = vmatpush1.msra.mxu0 %v1127
    %1624 = vmatprep.subr.mxu0 0.0
    %1625 = vmatpush1.msra.mxu0 %v1128
    %1626 = vmatprep.subr.mxu0 0.0
    %1627 = vmatpush1.msra.mxu0 %v1129
    %1628 = vmatprep.subr.mxu0 0.0
    %1629 = vmatpush1.msra.mxu0 %v1130
    %1630 = vmatprep.subr.mxu0 0.0
    %1631 = vmatpush1.msra.mxu0 %v1131
    %1632 = vmatprep.subr.mxu0 0.0
    %1633 = vmatpush1.msra.mxu0 %v1132
    %1634 = vmatprep.subr.mxu0 0.0
    %1635 = vmatpush1.msra.mxu0 %v1133
    %1636 = vmatprep.subr.mxu0 0.0
    %1637 = vmatpush1.msra.mxu0 %v1134
    %1638 = vmatprep.subr.mxu0 0.0
    %1639 = vmatpush1.msra.mxu0 %v1135
    %1640 = vmatprep.subr.mxu0 0.0
    %1641 = vmatpush1.msra.mxu0 %v1136
    %1642 = vmatprep.subr.mxu0 0.0
    %1643 = vmatpush1.msra.mxu0 %v1137
    %1644 = vmatprep.subr.mxu0 0.0
    %1645 = vmatpush1.msra.mxu0 %v1138
    %1646 = vmatprep.subr.mxu0 0.0
    %1647 = vmatpush1.msra.mxu0 %v1139
    %1648 = vmatprep.subr.mxu0 0.0
    %1649 = vmatpush1.msra.mxu0 %v1140
    %1650 = vmatprep.subr.mxu0 0.0
    %1651 = vmatpush1.msra.mxu0 %v1141
    %1652 = vmatprep.subr.mxu0 0.0
    %1653 = vmatpush1.msra.mxu0 %v1142
    %1654 = vmatprep.subr.mxu0 0.0
    %1655 = vmatpush1.msra.mxu0 %v1143
    %1656 = vmatprep.subr.mxu0 0.0
    %1657 = vmatpush1.msra.mxu0 %v1144
    %1658 = vmatprep.subr.mxu0 0.0
    %1659 = vmatpush1.msra.mxu0 %v1145
    %1660 = vmatprep.subr.mxu0 0.0
    %1661 = vmatpush1.msra.mxu0 %v1146
    %1662 = vmatprep.subr.mxu0 0.0
    %1663 = vmatpush1.msra.mxu0 %v1147
    %1664 = vmatprep.subr.mxu0 0.0
    %1665 = vmatpush1.msra.mxu0 %v1148
    %1666 = vmatprep.subr.mxu0 0.0
    %1667 = vmatpush1.msra.mxu0 %v1149
    %1668 = vmatprep.subr.mxu0 0.0
    %1669 = vmatpush1.msra.mxu0 %v1150
    %1670 = vmatprep.subr.mxu0 0.0
    %1671 = vmatpush1.msra.mxu0 %v1151
    %1672 = vmatprep.subr.mxu0 0.0
    %1673 = vmatpush1.msra.mxu0 %v1152
    %1674 = vmatprep.subr.mxu0 0.0
    %1675 = vmatpush1.msra.mxu0 %v1153
    %1676 = vmatprep.subr.mxu0 0.0
    %1677 = vmatpush1.msra.mxu0 %v1154
    %1678 = vmatprep.mubr.f32.mxu0 %v928
    %1679 = vmatmul.mubr.f32.gmra.mrb[0].mxu0 %v927
    %v1680 = vpop.f32.mrb[0].mxu0
    %v1681 = vadd.f32 %v1611, %v1680
    %v1682 = vpop.f32.mrb[0].mxu0
    %1683 = vdwg.mxu0
    %1684 = vmatprep.subr.mxu0 0.0
    %1685 = vmatpush1.msra.mxu0 %v1155
    %1686 = vmatprep.subr.mxu0 0.0
    %1687 = vmatpush1.msra.mxu0 %v1156
    %1688 = vmatprep.subr.mxu0 0.0
    %1689 = vmatpush1.msra.mxu0 %v1157
    %1690 = vmatprep.subr.mxu0 0.0
    %1691 = vmatpush1.msra.mxu0 %v1158
    %1692 = vmatprep.subr.mxu0 0.0
    %1693 = vmatpush1.msra.mxu0 %v1159
    %1694 = vmatprep.subr.mxu0 0.0
    %1695 = vmatpush1.msra.mxu0 %v1160
    %1696 = vmatprep.subr.mxu0 0.0
    %1697 = vmatpush1.msra.mxu0 %v1161
    %1698 = vmatprep.subr.mxu0 0.0
    %1699 = vmatpush1.msra.mxu0 %v1162
    %1700 = vmatprep.subr.mxu0 0.0
    %1701 = vmatpush1.msra.mxu0 %v1163
    %1702 = vmatprep.subr.mxu0 0.0
    %1703 = vmatpush1.msra.mxu0 %v1164
    %1704 = vmatprep.subr.mxu0 0.0
    %1705 = vmatpush1.msra.mxu0 %v1165
    %1706 = vmatprep.subr.mxu0 0.0
    %1707 = vmatpush1.msra.mxu0 %v1166
    %1708 = vmatprep.subr.mxu0 0.0
    %1709 = vmatpush1.msra.mxu0 %v1167
    %1710 = vmatprep.subr.mxu0 0.0
    %1711 = vmatpush1.msra.mxu0 %v1168
    %1712 = vmatprep.subr.mxu0 0.0
    %1713 = vmatpush1.msra.mxu0 %v1169
    %1714 = vmatprep.subr.mxu0 0.0
    %1715 = vmatpush1.msra.mxu0 %v1170
    %1716 = vmatprep.subr.mxu0 0.0
    %1717 = vmatpush1.msra.mxu0 %v1171
    %1718 = vmatprep.subr.mxu0 0.0
    %1719 = vmatpush1.msra.mxu0 %v1172
    %1720 = vmatprep.subr.mxu0 0.0
    %1721 = vmatpush1.msra.mxu0 %v1173
    %1722 = vmatprep.subr.mxu0 0.0
    %1723 = vmatpush1.msra.mxu0 %v1174
    %1724 = vmatprep.subr.mxu0 0.0
    %1725 = vmatpush1.msra.mxu0 %v1175
    %1726 = vmatprep.subr.mxu0 0.0
    %1727 = vmatpush1.msra.mxu0 %v1176
    %1728 = vmatprep.subr.mxu0 0.0
    %1729 = vmatpush1.msra.mxu0 %v1177
    %1730 = vmatprep.subr.mxu0 0.0
    %1731 = vmatpush1.msra.mxu0 %v1178
    %1732 = vmatprep.subr.mxu0 0.0
    %1733 = vmatpush1.msra.mxu0 %v1179
    %1734 = vmatprep.subr.mxu0 0.0
    %1735 = vmatpush1.msra.mxu0 %v1180
    %1736 = vmatprep.subr.mxu0 0.0
    %1737 = vmatpush1.msra.mxu0 %v1181
    %1738 = vmatprep.subr.mxu0 0.0
    %1739 = vmatpush1.msra.mxu0 %v1182
    %1740 = vmatprep.subr.mxu0 0.0
    %1741 = vmatpush1.msra.mxu0 %v1183
    %1742 = vmatprep.subr.mxu0 0.0
    %1743 = vmatpush1.msra.mxu0 %v1184
    %1744 = vmatprep.subr.mxu0 0.0
    %1745 = vmatpush1.msra.mxu0 %v1185
    %1746 = vmatprep.subr.mxu0 0.0
    %1747 = vmatpush1.msra.mxu0 %v1186
    %1748 = vmatprep.mubr.f32.mxu0 %v930
    %1749 = vmatmul.mubr.f32.gmra.mrb[0].mxu0 %v929
    %v1750 = vpop.f32.mrb[0].mxu0
    %v1751 = vadd.f32 %v1681, %v1750
    %v1752 = vpop.f32.mrb[0].mxu0
    %1753 = vdwg.mxu0
    %1754 = vmax.xlane.f32.xlu0 %v1751
    %v1755 = vpop.xlane.xlu0 %1754
    %v1756 = vlaneseq
    %v1757 = vand.u32 %v1756, 127
    %vm1758 = vcmp.eq.f32.partialorder %v1751, %v1755
    %v1759 = vsel %vm1758, %v1757, 128
    %v1760 = vand.u32 %v1759, 65535
    %v1761 = vshra.s32 %v1759, 16
    %v1762 = vcvt.s32.f32 %v1760
    %v1763 = vcvt.s32.f32 %v1761
    %1764 = vmin.xlane.f32.xlu0 %v1763
    %v1765 = vpop.xlane.xlu0 %1764
    %vm1766 = vcmp.eq.f32.partialorder %v1763, %v1765
    %v1767 = vsel %vm1766, %v1762, inf
    %1768 = vmin.xlane.f32.xlu0 %v1767
    %v1769 = vpop.xlane.xlu0 %1768
    %v1770 = vcvt.f32.s32 %v1769
    %v1771 = vcvt.f32.s32 %v1765
    %v1772 = vshll.u32 %v1771, 16
    %v1773 = vadd.s32 %v1772, %v1770
    %v1774 = vsub.f32 %v1751, %v1755
    %v1775 = vmul.f32 %v1774, 1.442695
    %v1776 = vpow.pop %v1775
    %1777 = vadd.xlane.f32.xlu0 %v1776
    %v1778 = vpop.xlane.xlu0 %1777
    %v1779 = vrcp.pop %v1778
    %v1780 = vmul.f32 %v1776, %v1779
    %v1781 = vcvt.s32.f32 %v1773
    %vm1782 = vcmp.eq.s32.totalorder %v1757, 0
    %vm1783 = vcmp.eq.s32.totalorder %v1757, 1
    %1785 = vset.pattern.permute.xlu0 1
    %1786 = vperm.xlu0 %1785, %v1780
    %v1787 = vpop.permute.xlu0 %1786
    %v1789 = vsel %vm1783, %v1787, 0.0
    %v1790 = vsel %vm1782, %v1781, %v1789
    %1791 = vst [vmem:[#allocation8] sm:$0xff] %v1790
    // Predicated region
    $region38: #{tpu_custom_call.1} parent=1 // pred_check
      _
    $region39: #{tpu_custom_call.1} parent=1 // pred_check_branch
      %1793 = sbr.rel (0) target = $region41
    $region40: #{tpu_custom_call.1} parent=1 // pred_region
      %s1795 = ssub.s32 128, 128
      %1796 = vsyncadd [#allocation4], %s1795
      %s1798 = sshll.u32 [#allocation8], 4
      %s1799 = int_to_ptr.vmem [resolvable:$true] %s1798
      %1801 = dma.vmem_to_hbm [thread:$0]  %s1799, 128, %s6, [#allocation4]
    $region41: #{tpu_custom_call.1} parent=1 // pred_fallthru
      _
    // Predicated region
    $region42: #{tpu_custom_call.1} parent=1 // pred_check
      _
    $region43: #{tpu_custom_call.1} parent=1 // pred_check_branch
      %1803 = sbr.rel (0) target = $region45
    $region44: #{tpu_custom_call.1} parent=1 // pred_region
      %1804 = dma.done [#allocation4], 128
    $region45: #{tpu_custom_call.1} parent=1 // pred_fallthru
      _
    %1805 = vsyncpa [#allocation3], 1
    %1806 = vsyncpa [#allocation6], 1
    %1807 = vsyncpa [#allocation4], 1

</llo_original>
